<compile_context>
chip_gen: v6e
topology: v6e:2x2x1
jax: 0.10.0
libtpu: 0.0.40
codegen_flags: <defaults>
</compile_context>

<pallas_src>
import functools

import numpy as np
import jax
import jax.numpy as jnp
from jax import lax
from jax.experimental import pallas as pl
from jax.experimental.pallas import tpu as pltpu


def _gcn_block_kernel(x_ref, xt_ref, a_ref, theta_ref, gcn_ref, S_ref, loss_ref, *, K, C):
    # x_ref:    (B, V, F)   batch block, f32
    # xt_ref:   (B, F, V)   same data, vertex axis on lanes (transposed in the wrapper)
    # a_ref:    (F,)        Graph_Learn.a in SMEM (per-feature scalars)
    # theta_ref:(K, F, C)   cheb_conv.Theta, bf16 (MXU operand)
    # gcn_ref:  (B, V, C)
    # S_ref:    (B, V, V)
    # loss_ref: (B, 1, 2)   per-sample [sum S^2, sum_i sum_m S[i,m]*q[m]]
    B, V, F = x_ref.shape

    x = x_ref[...]                                    # (B, V, F) f32
    xt = xt_ref[...]                                  # (B, F, V) f32

    # ---------------- Graph_Learn ----------------
    # dist[b,i,j] = sum_f a[f]*|x[b,i,f]-x[b,j,f]|, accumulated as lane-dense (B,V,V)
    # slabs so the F reduction is plain VALU adds (no (B,V,V,F) intermediate).
    # q[b,m] = sum_{f,j} (x[b,m,f]-x[b,j,f])^2 in closed form (needed by diff_loss).
    dist = jnp.zeros((B, V, V), jnp.float32)
    q = jnp.zeros((B, 1, V), jnp.float32)
    for f in range(F):
        xi = x[:, :, f:f + 1]                         # (B, V, 1)  sublane-oriented
        xj = xt[:, f:f + 1, :]                        # (B, 1, V)  lane-oriented
        dist = dist + a_ref[f] * jnp.abs(xi - xj)     # a[f] is an SMEM scalar
        s1 = jnp.sum(xj, axis=2, keepdims=True)       # (B, 1, 1): sum_j x[b,j,f]
        s2 = jnp.sum(xj * xj, axis=2, keepdims=True)  # (B, 1, 1): sum_j x[b,j,f]^2
        q = q + (V * xj * xj - 2.0 * xj * s1 + s2)

    tmpS = jnp.exp(-jnp.maximum(dist, 0.0))           # exp(-relu(.))
    denom = jnp.sum(tmpS, axis=1, keepdims=True)      # (B, 1, V): torch sum over axis=1
    inv_denom = pl.reciprocal(denom, approx=False)    # reciprocal of the small tensor
    S = tmpS * inv_denom                              # (B, V, V)
    S_ref[...] = S

    # Column sums of S: reused for diff_loss AND for diag_embed(sum(W, axis=1)).
    colS = jnp.sum(S, axis=1, keepdims=True)          # (B, 1, V)

    # Per-sample loss partials, packed into one (B, 1, 2) store:
    #   [...,0] = sum_{i,j} S^2                               -> F_norm_loss
    #   [...,1] = sum_{i,m,f} S[i,m]*Q[m,f] = sum_m colS[m]*q[m]  -> diff_loss (3-D branch)
    s2sum = jnp.sum(jnp.sum(S * S, axis=2, keepdims=True), axis=1, keepdims=True)  # (B,1,1)
    dl = jnp.sum(colS * q, axis=2, keepdims=True)                                  # (B,1,1)
    loss_ref[...] = jnp.concatenate([s2sum, dl], axis=2)                           # (B,1,2)

    # ---------------- cheb_conv ----------------
    row = lax.broadcasted_iota(jnp.int32, (V, V), 0)
    col = lax.broadcasted_iota(jnp.int32, (V, V), 1)
    eye = (row == col).astype(jnp.float32)            # (V, V)

    # L_t = D - W - I, D = diag_embed(sum(W, axis=1)), lambda_max approximated as 2.
    L_t = eye[None, :, :] * colS - S - eye[None, :, :]   # (B, V, V)

    # x @ Theta_k for every k (bf16 MXU operands, f32 accumulation).  Each chunk is
    # produced contiguously -> no unaligned lane slicing of a fat (F, K*C) product.
    xb = x.reshape(B * V, F).astype(jnp.bfloat16)
    xt_chunks = []
    for k in range(K):
        xtk = jnp.dot(xb, theta_ref[k], preferred_element_type=jnp.float32)  # (B*V, C)
        xt_chunks.append(xtk.reshape(B, V, C))

    acc = xt_chunks[0]                                # T_0 = I -> contribution is x @ Theta_0
    if K >= 2:
        # NOTE: the PyTorch source uses an ELEMENTWISE (Hadamard) product in the
        # Chebyshev recursion (`2*L_t*T_{k-1} - T_{k-2}`); reproduced exactly
        # (deliberate bug-compatibility), kept in f32 on the VPU.
        t_terms = [L_t]
        t_m2 = eye[None, :, :]
        t_m1 = L_t
        for k in range(2, K):
            t_k = 2.0 * L_t * t_m1 - t_m2
            t_terms.append(t_k)
            t_m2, t_m1 = t_m1, t_k

        # Fuse the K-1 graph matmuls into ONE batched MXU matmul with contraction
        # depth (K-1)*V (fills the 256-deep MXU far better, one push/drain).
        if K == 2:
            t_cat = t_terms[0]                        # (B, V, V)
            xt_cat = xt_chunks[1]                     # (B, V, C)
        else:
            t_cat = jnp.concatenate(t_terms, axis=2)          # (B, V, (K-1)*V)
            xt_cat = jnp.concatenate(xt_chunks[1:], axis=1)   # (B, (K-1)*V, C)
        acc = acc + lax.dot_general(
            t_cat.astype(jnp.bfloat16), xt_cat.astype(jnp.bfloat16),
            dimension_numbers=(((2,), (1,)), ((0,), (0,))),
            preferred_element_type=jnp.float32)

    gcn_ref[...] = jnp.maximum(acc, 0.0).astype(gcn_ref.dtype)


def _pick_block_batch(N, V, F, K, C, budget_bytes=24 * 1024 * 1024):
    """Batch block size derived from a VMEM budget (not from N)."""
    # Rough per-sample live bytes: f32 (V,V) slabs for Graph_Learn + Chebyshev terms,
    # bf16/f32 XT chunks, and double-buffered input/output blocks.
    per_sample = 4 * ((8 + 2 * K) * V * V + (3 * K + 2) * V * C + 8 * V * F)
    b = max(1, budget_bytes // per_sample)
    # At least two grid steps so both v7x TensorCores get work ("parallel" grid axis).
    b = min(b, max(1, -(-N // 2)))
    if b >= 8:
        b = (b // 8) * 8        # multiple of 8 -> dense sublane tiles for the batch dim
    return max(1, min(b, N))


def gcn_block_forward(x, a, theta, alpha, block_batch=None):
    """x: (N, V, F), a: (F, 1), theta: (K, F, C). Returns (gcn, S, ajloss)."""
    N, V, F = x.shape
    K, F2, C = theta.shape
    assert F2 == F

    x_f32 = x.astype(jnp.float32)
    xt_f32 = jnp.transpose(x_f32, (0, 2, 1))            # (N, F, V): lane-oriented copy
    a_smem = a.reshape(F).astype(jnp.float32)           # per-feature scalars -> SMEM
    theta_b = theta.astype(jnp.bfloat16)                 # MXU operand in bf16

    if block_batch is None:
        block_batch = _pick_block_batch(N, V, F, K, C)
    B = int(max(1, min(block_batch, N)))
    n_blocks = -(-N // B)
    N_pad = n_blocks * B
    if N_pad != N:
        pad = ((0, N_pad - N), (0, 0), (0, 0))
        x_f32 = jnp.pad(x_f32, pad)
        xt_f32 = jnp.pad(xt_f32, pad)

    kernel = functools.partial(_gcn_block_kernel, K=K, C=C)
    gcn, S, loss = pl.pallas_call(
        kernel,
        out_shape=(
            jax.ShapeDtypeStruct((N_pad, V, C), jnp.float32),
            jax.ShapeDtypeStruct((N_pad, V, V), jnp.float32),
            jax.ShapeDtypeStruct((N_pad, 1, 2), jnp.float32),
        ),
        grid_spec=pltpu.PrefetchScalarGridSpec(
            num_scalar_prefetch=0,
            grid=(n_blocks,),
            in_specs=[
                pl.BlockSpec((B, V, F), lambda n: (n, 0, 0)),
                pl.BlockSpec((B, F, V), lambda n: (n, 0, 0)),
                pl.BlockSpec(memory_space=pltpu.MemorySpace.SMEM),
                pl.BlockSpec((K, F, C), lambda n: (0, 0, 0)),
            ],
            out_specs=[
                pl.BlockSpec((B, V, C), lambda n: (n, 0, 0)),
                pl.BlockSpec((B, V, V), lambda n: (n, 0, 0)),
                pl.BlockSpec((B, 1, 2), lambda n: (n, 0, 0)),
            ],
        ),
        compiler_params=pltpu.CompilerParams(
            dimension_semantics=("parallel",),
            vmem_limit_bytes=48 * 1024 * 1024),
    )(x_f32, xt_f32, a_smem, theta_b)

    gcn = gcn[:N]
    S = S[:N]
    loss = loss[:N, 0, :]                                 # (N, 2)

    # Glue (matches F_norm_loss + diff_loss for a 3-D S exactly):
    Sloss = jnp.sum(loss[:, 0]) / N                       # sum(mean(S**2, axis=0)), Falpha=1
    dloss = alpha * jnp.sum(loss[:, 1])                   # alpha * sum(matmul(S, sum(diff^2, 2)))
    ajloss = Sloss + dloss
    return gcn, S, ajloss


def gcn_block_reference(x, a, theta, alpha):
    """Pure-JAX reference replicating the PyTorch forward exactly (f32 HIGHEST)."""
    N, V, F = x.shape
    K, _, C = theta.shape
    hp = lax.Precision.HIGHEST
    diff = x[:, :, None, :] - x[:, None, :, :]                      # (N,V,V,F): x_i - x_j
    dist = jnp.einsum('nijf,f->nij', jnp.abs(diff), a[:, 0], precision=hp)
    tmpS = jnp.exp(-jnp.maximum(dist, 0.0))
    S = tmpS / jnp.sum(tmpS, axis=1, keepdims=True)
    Sloss = jnp.sum(jnp.mean(S ** 2, axis=0))
    # diff_loss with a 3-D S (the branch the module actually takes):
    #   alpha * sum(matmul(S, sum(diff**2, axis=2)))
    Q = jnp.sum(diff ** 2, axis=2)                                  # (N, V, F)
    dloss = alpha * jnp.sum(jnp.einsum('nim,nmf->nif', S, Q, precision=hp))
    ajloss = Sloss + dloss

    deg = jnp.sum(S, axis=1)                                        # (N, V)
    eye = jnp.eye(V, dtype=jnp.float32)
    D = eye[None] * deg[:, None, :]                                 # diag_embed
    L = D - S
    L_t = L - eye[None]
    Ts = [jnp.broadcast_to(eye, (N, V, V)), L_t]
    for i in range(2, K):
        Ts.append(2.0 * L_t * Ts[i - 1] - Ts[i - 2])                # elementwise (as in torch)
    out = jnp.zeros((N, V, C), jnp.float32)
    for k in range(K):
        rhs = jnp.einsum('nuv,nvf->nuf', Ts[k], x, precision=hp)
        out = out + jnp.einsum('nuf,fc->nuc', rhs, theta[k], precision=hp)
    gcn = jnp.maximum(out, 0.0)
    return gcn, S, ajloss


if __name__ == "__main__":
    key = jax.random.PRNGKey(0)
    N, V, F = 2, 16, 8            # batch, vertices, features
    K, n_filters = 3, 32          # Chebyshev order, node_feature_hidden1
    alpha = 0.1                   # GLalpha

    kx, kt = jax.random.split(key)
    x = jax.random.normal(kx, (N, V, F), dtype=jnp.float32)
    # Graph_Learn.a is initialized with ones_ in the module
    a = jnp.ones((F, 1), dtype=jnp.float32)
    # cheb_conv.Theta[k] initialized with uniform_ (deterministic here via PRNG)
    theta = jax.random.uniform(kt, (K, F, n_filters), dtype=jnp.float32)

    fwd = jax.jit(lambda xx: gcn_block_forward(xx, a, theta, alpha))
    gcn, S, ajloss = fwd(x)
    jax.block_until_ready((gcn, S, ajloss))

    gcn_r, S_r, aj_r = gcn_block_reference(x, a, theta, alpha)
    # S and ajloss are pure f32 VPU math in the kernel -> tight tolerance.
    np.testing.assert_allclose(np.asarray(S), np.asarray(S_r), rtol=1e-3, atol=1e-5)
    np.testing.assert_allclose(np.asarray(ajloss), np.asarray(aj_r), rtol=1e-3, atol=1e-3)
    # gcn uses bf16 MXU operands (f32 accumulation) -> compare with a matching tolerance.
    np.testing.assert_allclose(np.asarray(gcn), np.asarray(gcn_r), rtol=5e-2, atol=8e-2)

    print("KERNEL_OK")
</pallas_src>

<mosaic_0001>
module attributes {stable_mosaic.version = 11 : i64} {
  func.func @_gcn_block_kernel(%arg0: i32, %arg1: memref<1x16x8xf32, #tpu.memory_space<vmem>>, %arg2: memref<1x8x16xf32, #tpu.memory_space<vmem>>, %arg3: memref<8xf32, #tpu.memory_space<smem>>, %arg4: memref<3x8x32xbf16, #tpu.memory_space<vmem>>, %arg5: memref<1x16x32xf32, #tpu.memory_space<vmem>>, %arg6: memref<1x16x16xf32, #tpu.memory_space<vmem>>, %arg7: memref<1x1x2xf32, #tpu.memory_space<vmem>>) attributes {dimension_semantics = [#tpu.dimension_semantics<parallel>], iteration_bounds = array<i64: 2>, scalar_prefetch = 0 : i64, scratch_operands = 0 : i64, tpu.core_type = #tpu.core_type<tc>, window_params = [{transform_indices = @transform_0, window_bounds = array<i64: 1, 16, 8>}, {transform_indices = @transform_1, window_bounds = array<i64: 1, 8, 16>}, {transform_indices = @transform_2, window_bounds = array<i64: 8>}, {pipeline_mode = #tpu.pipeline_mode<synchronous>, transform_indices = @transform_3, window_bounds = array<i64: 3, 8, 32>}, {transform_indices = @transform_4, window_bounds = array<i64: 1, 16, 32>}, {transform_indices = @transform_5, window_bounds = array<i64: 1, 16, 16>}, {transform_indices = @transform_6, window_bounds = array<i64: 1, 1, 2>}]} {
    %c0 = arith.constant 0 : index
    %c0_0 = arith.constant 0 : index
    %c0_1 = arith.constant 0 : index
    %0 = vector.load %arg1[%c0, %c0_0, %c0_1] : memref<1x16x8xf32, #tpu.memory_space<vmem>>, vector<1x16x8xf32>
    %c0_2 = arith.constant 0 : index
    %c0_3 = arith.constant 0 : index
    %c0_4 = arith.constant 0 : index
    %1 = vector.load %arg2[%c0_2, %c0_3, %c0_4] : memref<1x8x16xf32, #tpu.memory_space<vmem>>, vector<1x8x16xf32>
    %cst = arith.constant 0.000000e+00 : f32
    %2 = vector.broadcast %cst : f32 to vector<1x16x16xf32>
    %cst_5 = arith.constant 0.000000e+00 : f32
    %3 = vector.broadcast %cst_5 : f32 to vector<1x1x16xf32>
    %4 = vector.extract_strided_slice %0 {offsets = [0, 0, 0], sizes = [1, 16, 1], strides = [1, 1, 1]} : vector<1x16x8xf32> to vector<1x16x1xf32>
    %5 = vector.extract_strided_slice %1 {offsets = [0, 0, 0], sizes = [1, 1, 16], strides = [1, 1, 1]} : vector<1x8x16xf32> to vector<1x1x16xf32>
    %c0_6 = arith.constant 0 : index
    %6 = memref.load %arg3[%c0_6] : memref<8xf32, #tpu.memory_space<smem>>
    %7 = vector.broadcast %4 : vector<1x16x1xf32> to vector<1x16x16xf32>
    %8 = vector.broadcast %5 : vector<1x1x16xf32> to vector<1x16x16xf32>
    %9 = arith.subf %7, %8 : vector<1x16x16xf32>
    %10 = math.absf %9 : vector<1x16x16xf32>
    %11 = vector.broadcast %6 : f32 to vector<1x16x16xf32>
    %12 = arith.mulf %11, %10 : vector<1x16x16xf32>
    %13 = arith.addf %2, %12 : vector<1x16x16xf32>
    %cst_7 = arith.constant dense<0.000000e+00> : vector<1x1xf32>
    %14 = vector.multi_reduction <add>, %5, %cst_7 [2] : vector<1x1x16xf32> to vector<1x1xf32>
    %15 = vector.shape_cast %14 : vector<1x1xf32> to vector<1x1x1xf32>
    %16 = arith.mulf %5, %5 : vector<1x1x16xf32>
    %cst_8 = arith.constant dense<0.000000e+00> : vector<1x1xf32>
    %17 = vector.multi_reduction <add>, %16, %cst_8 [2] : vector<1x1x16xf32> to vector<1x1xf32>
    %18 = vector.shape_cast %17 : vector<1x1xf32> to vector<1x1x1xf32>
    %cst_9 = arith.constant 1.600000e+01 : f32
    %19 = vector.broadcast %cst_9 : f32 to vector<1x1x16xf32>
    %20 = arith.mulf %19, %5 : vector<1x1x16xf32>
    %21 = arith.mulf %20, %5 : vector<1x1x16xf32>
    %cst_10 = arith.constant 2.000000e+00 : f32
    %22 = vector.broadcast %cst_10 : f32 to vector<1x1x16xf32>
    %23 = arith.mulf %22, %5 : vector<1x1x16xf32>
    %24 = vector.broadcast %15 : vector<1x1x1xf32> to vector<1x1x16xf32>
    %25 = arith.mulf %23, %24 : vector<1x1x16xf32>
    %26 = arith.subf %21, %25 : vector<1x1x16xf32>
    %27 = vector.broadcast %18 : vector<1x1x1xf32> to vector<1x1x16xf32>
    %28 = arith.addf %26, %27 : vector<1x1x16xf32>
    %29 = arith.addf %3, %28 : vector<1x1x16xf32>
    %30 = vector.extract_strided_slice %0 {offsets = [0, 0, 1], sizes = [1, 16, 1], strides = [1, 1, 1]} : vector<1x16x8xf32> to vector<1x16x1xf32>
    %31 = vector.extract_strided_slice %1 {offsets = [0, 1, 0], sizes = [1, 1, 16], strides = [1, 1, 1]} : vector<1x8x16xf32> to vector<1x1x16xf32>
    %c1 = arith.constant 1 : index
    %32 = memref.load %arg3[%c1] : memref<8xf32, #tpu.memory_space<smem>>
    %33 = vector.broadcast %30 : vector<1x16x1xf32> to vector<1x16x16xf32>
    %34 = vector.broadcast %31 : vector<1x1x16xf32> to vector<1x16x16xf32>
    %35 = arith.subf %33, %34 : vector<1x16x16xf32>
    %36 = math.absf %35 : vector<1x16x16xf32>
    %37 = vector.broadcast %32 : f32 to vector<1x16x16xf32>
    %38 = arith.mulf %37, %36 : vector<1x16x16xf32>
    %39 = arith.addf %13, %38 : vector<1x16x16xf32>
    %cst_11 = arith.constant dense<0.000000e+00> : vector<1x1xf32>
    %40 = vector.multi_reduction <add>, %31, %cst_11 [2] : vector<1x1x16xf32> to vector<1x1xf32>
    %41 = vector.shape_cast %40 : vector<1x1xf32> to vector<1x1x1xf32>
    %42 = arith.mulf %31, %31 : vector<1x1x16xf32>
    %cst_12 = arith.constant dense<0.000000e+00> : vector<1x1xf32>
    %43 = vector.multi_reduction <add>, %42, %cst_12 [2] : vector<1x1x16xf32> to vector<1x1xf32>
    %44 = vector.shape_cast %43 : vector<1x1xf32> to vector<1x1x1xf32>
    %cst_13 = arith.constant 1.600000e+01 : f32
    %45 = vector.broadcast %cst_13 : f32 to vector<1x1x16xf32>
    %46 = arith.mulf %45, %31 : vector<1x1x16xf32>
    %47 = arith.mulf %46, %31 : vector<1x1x16xf32>
    %cst_14 = arith.constant 2.000000e+00 : f32
    %48 = vector.broadcast %cst_14 : f32 to vector<1x1x16xf32>
    %49 = arith.mulf %48, %31 : vector<1x1x16xf32>
    %50 = vector.broadcast %41 : vector<1x1x1xf32> to vector<1x1x16xf32>
    %51 = arith.mulf %49, %50 : vector<1x1x16xf32>
    %52 = arith.subf %47, %51 : vector<1x1x16xf32>
    %53 = vector.broadcast %44 : vector<1x1x1xf32> to vector<1x1x16xf32>
    %54 = arith.addf %52, %53 : vector<1x1x16xf32>
    %55 = arith.addf %29, %54 : vector<1x1x16xf32>
    %56 = vector.extract_strided_slice %0 {offsets = [0, 0, 2], sizes = [1, 16, 1], strides = [1, 1, 1]} : vector<1x16x8xf32> to vector<1x16x1xf32>
    %57 = vector.extract_strided_slice %1 {offsets = [0, 2, 0], sizes = [1, 1, 16], strides = [1, 1, 1]} : vector<1x8x16xf32> to vector<1x1x16xf32>
    %c2 = arith.constant 2 : index
    %58 = memref.load %arg3[%c2] : memref<8xf32, #tpu.memory_space<smem>>
    %59 = vector.broadcast %56 : vector<1x16x1xf32> to vector<1x16x16xf32>
    %60 = vector.broadcast %57 : vector<1x1x16xf32> to vector<1x16x16xf32>
    %61 = arith.subf %59, %60 : vector<1x16x16xf32>
    %62 = math.absf %61 : vector<1x16x16xf32>
    %63 = vector.broadcast %58 : f32 to vector<1x16x16xf32>
    %64 = arith.mulf %63, %62 : vector<1x16x16xf32>
    %65 = arith.addf %39, %64 : vector<1x16x16xf32>
    %cst_15 = arith.constant dense<0.000000e+00> : vector<1x1xf32>
    %66 = vector.multi_reduction <add>, %57, %cst_15 [2] : vector<1x1x16xf32> to vector<1x1xf32>
    %67 = vector.shape_cast %66 : vector<1x1xf32> to vector<1x1x1xf32>
    %68 = arith.mulf %57, %57 : vector<1x1x16xf32>
    %cst_16 = arith.constant dense<0.000000e+00> : vector<1x1xf32>
    %69 = vector.multi_reduction <add>, %68, %cst_16 [2] : vector<1x1x16xf32> to vector<1x1xf32>
    %70 = vector.shape_cast %69 : vector<1x1xf32> to vector<1x1x1xf32>
    %cst_17 = arith.constant 1.600000e+01 : f32
    %71 = vector.broadcast %cst_17 : f32 to vector<1x1x16xf32>
    %72 = arith.mulf %71, %57 : vector<1x1x16xf32>
    %73 = arith.mulf %72, %57 : vector<1x1x16xf32>
    %cst_18 = arith.constant 2.000000e+00 : f32
    %74 = vector.broadcast %cst_18 : f32 to vector<1x1x16xf32>
    %75 = arith.mulf %74, %57 : vector<1x1x16xf32>
    %76 = vector.broadcast %67 : vector<1x1x1xf32> to vector<1x1x16xf32>
    %77 = arith.mulf %75, %76 : vector<1x1x16xf32>
    %78 = arith.subf %73, %77 : vector<1x1x16xf32>
    %79 = vector.broadcast %70 : vector<1x1x1xf32> to vector<1x1x16xf32>
    %80 = arith.addf %78, %79 : vector<1x1x16xf32>
    %81 = arith.addf %55, %80 : vector<1x1x16xf32>
    %82 = vector.extract_strided_slice %0 {offsets = [0, 0, 3], sizes = [1, 16, 1], strides = [1, 1, 1]} : vector<1x16x8xf32> to vector<1x16x1xf32>
    %83 = vector.extract_strided_slice %1 {offsets = [0, 3, 0], sizes = [1, 1, 16], strides = [1, 1, 1]} : vector<1x8x16xf32> to vector<1x1x16xf32>
    %c3 = arith.constant 3 : index
    %84 = memref.load %arg3[%c3] : memref<8xf32, #tpu.memory_space<smem>>
    %85 = vector.broadcast %82 : vector<1x16x1xf32> to vector<1x16x16xf32>
    %86 = vector.broadcast %83 : vector<1x1x16xf32> to vector<1x16x16xf32>
    %87 = arith.subf %85, %86 : vector<1x16x16xf32>
    %88 = math.absf %87 : vector<1x16x16xf32>
    %89 = vector.broadcast %84 : f32 to vector<1x16x16xf32>
    %90 = arith.mulf %89, %88 : vector<1x16x16xf32>
    %91 = arith.addf %65, %90 : vector<1x16x16xf32>
    %cst_19 = arith.constant dense<0.000000e+00> : vector<1x1xf32>
    %92 = vector.multi_reduction <add>, %83, %cst_19 [2] : vector<1x1x16xf32> to vector<1x1xf32>
    %93 = vector.shape_cast %92 : vector<1x1xf32> to vector<1x1x1xf32>
    %94 = arith.mulf %83, %83 : vector<1x1x16xf32>
    %cst_20 = arith.constant dense<0.000000e+00> : vector<1x1xf32>
    %95 = vector.multi_reduction <add>, %94, %cst_20 [2] : vector<1x1x16xf32> to vector<1x1xf32>
    %96 = vector.shape_cast %95 : vector<1x1xf32> to vector<1x1x1xf32>
    %cst_21 = arith.constant 1.600000e+01 : f32
    %97 = vector.broadcast %cst_21 : f32 to vector<1x1x16xf32>
    %98 = arith.mulf %97, %83 : vector<1x1x16xf32>
    %99 = arith.mulf %98, %83 : vector<1x1x16xf32>
    %cst_22 = arith.constant 2.000000e+00 : f32
    %100 = vector.broadcast %cst_22 : f32 to vector<1x1x16xf32>
    %101 = arith.mulf %100, %83 : vector<1x1x16xf32>
    %102 = vector.broadcast %93 : vector<1x1x1xf32> to vector<1x1x16xf32>
    %103 = arith.mulf %101, %102 : vector<1x1x16xf32>
    %104 = arith.subf %99, %103 : vector<1x1x16xf32>
    %105 = vector.broadcast %96 : vector<1x1x1xf32> to vector<1x1x16xf32>
    %106 = arith.addf %104, %105 : vector<1x1x16xf32>
    %107 = arith.addf %81, %106 : vector<1x1x16xf32>
    %108 = vector.extract_strided_slice %0 {offsets = [0, 0, 4], sizes = [1, 16, 1], strides = [1, 1, 1]} : vector<1x16x8xf32> to vector<1x16x1xf32>
    %109 = vector.extract_strided_slice %1 {offsets = [0, 4, 0], sizes = [1, 1, 16], strides = [1, 1, 1]} : vector<1x8x16xf32> to vector<1x1x16xf32>
    %c4 = arith.constant 4 : index
    %110 = memref.load %arg3[%c4] : memref<8xf32, #tpu.memory_space<smem>>
    %111 = vector.broadcast %108 : vector<1x16x1xf32> to vector<1x16x16xf32>
    %112 = vector.broadcast %109 : vector<1x1x16xf32> to vector<1x16x16xf32>
    %113 = arith.subf %111, %112 : vector<1x16x16xf32>
    %114 = math.absf %113 : vector<1x16x16xf32>
    %115 = vector.broadcast %110 : f32 to vector<1x16x16xf32>
    %116 = arith.mulf %115, %114 : vector<1x16x16xf32>
    %117 = arith.addf %91, %116 : vector<1x16x16xf32>
    %cst_23 = arith.constant dense<0.000000e+00> : vector<1x1xf32>
    %118 = vector.multi_reduction <add>, %109, %cst_23 [2] : vector<1x1x16xf32> to vector<1x1xf32>
    %119 = vector.shape_cast %118 : vector<1x1xf32> to vector<1x1x1xf32>
    %120 = arith.mulf %109, %109 : vector<1x1x16xf32>
    %cst_24 = arith.constant dense<0.000000e+00> : vector<1x1xf32>
    %121 = vector.multi_reduction <add>, %120, %cst_24 [2] : vector<1x1x16xf32> to vector<1x1xf32>
    %122 = vector.shape_cast %121 : vector<1x1xf32> to vector<1x1x1xf32>
    %cst_25 = arith.constant 1.600000e+01 : f32
    %123 = vector.broadcast %cst_25 : f32 to vector<1x1x16xf32>
    %124 = arith.mulf %123, %109 : vector<1x1x16xf32>
    %125 = arith.mulf %124, %109 : vector<1x1x16xf32>
    %cst_26 = arith.constant 2.000000e+00 : f32
    %126 = vector.broadcast %cst_26 : f32 to vector<1x1x16xf32>
    %127 = arith.mulf %126, %109 : vector<1x1x16xf32>
    %128 = vector.broadcast %119 : vector<1x1x1xf32> to vector<1x1x16xf32>
    %129 = arith.mulf %127, %128 : vector<1x1x16xf32>
    %130 = arith.subf %125, %129 : vector<1x1x16xf32>
    %131 = vector.broadcast %122 : vector<1x1x1xf32> to vector<1x1x16xf32>
    %132 = arith.addf %130, %131 : vector<1x1x16xf32>
    %133 = arith.addf %107, %132 : vector<1x1x16xf32>
    %134 = vector.extract_strided_slice %0 {offsets = [0, 0, 5], sizes = [1, 16, 1], strides = [1, 1, 1]} : vector<1x16x8xf32> to vector<1x16x1xf32>
    %135 = vector.extract_strided_slice %1 {offsets = [0, 5, 0], sizes = [1, 1, 16], strides = [1, 1, 1]} : vector<1x8x16xf32> to vector<1x1x16xf32>
    %c5 = arith.constant 5 : index
    %136 = memref.load %arg3[%c5] : memref<8xf32, #tpu.memory_space<smem>>
    %137 = vector.broadcast %134 : vector<1x16x1xf32> to vector<1x16x16xf32>
    %138 = vector.broadcast %135 : vector<1x1x16xf32> to vector<1x16x16xf32>
    %139 = arith.subf %137, %138 : vector<1x16x16xf32>
    %140 = math.absf %139 : vector<1x16x16xf32>
    %141 = vector.broadcast %136 : f32 to vector<1x16x16xf32>
    %142 = arith.mulf %141, %140 : vector<1x16x16xf32>
    %143 = arith.addf %117, %142 : vector<1x16x16xf32>
    %cst_27 = arith.constant dense<0.000000e+00> : vector<1x1xf32>
    %144 = vector.multi_reduction <add>, %135, %cst_27 [2] : vector<1x1x16xf32> to vector<1x1xf32>
    %145 = vector.shape_cast %144 : vector<1x1xf32> to vector<1x1x1xf32>
    %146 = arith.mulf %135, %135 : vector<1x1x16xf32>
    %cst_28 = arith.constant dense<0.000000e+00> : vector<1x1xf32>
    %147 = vector.multi_reduction <add>, %146, %cst_28 [2] : vector<1x1x16xf32> to vector<1x1xf32>
    %148 = vector.shape_cast %147 : vector<1x1xf32> to vector<1x1x1xf32>
    %cst_29 = arith.constant 1.600000e+01 : f32
    %149 = vector.broadcast %cst_29 : f32 to vector<1x1x16xf32>
    %150 = arith.mulf %149, %135 : vector<1x1x16xf32>
    %151 = arith.mulf %150, %135 : vector<1x1x16xf32>
    %cst_30 = arith.constant 2.000000e+00 : f32
    %152 = vector.broadcast %cst_30 : f32 to vector<1x1x16xf32>
    %153 = arith.mulf %152, %135 : vector<1x1x16xf32>
    %154 = vector.broadcast %145 : vector<1x1x1xf32> to vector<1x1x16xf32>
    %155 = arith.mulf %153, %154 : vector<1x1x16xf32>
    %156 = arith.subf %151, %155 : vector<1x1x16xf32>
    %157 = vector.broadcast %148 : vector<1x1x1xf32> to vector<1x1x16xf32>
    %158 = arith.addf %156, %157 : vector<1x1x16xf32>
    %159 = arith.addf %133, %158 : vector<1x1x16xf32>
    %160 = vector.extract_strided_slice %0 {offsets = [0, 0, 6], sizes = [1, 16, 1], strides = [1, 1, 1]} : vector<1x16x8xf32> to vector<1x16x1xf32>
    %161 = vector.extract_strided_slice %1 {offsets = [0, 6, 0], sizes = [1, 1, 16], strides = [1, 1, 1]} : vector<1x8x16xf32> to vector<1x1x16xf32>
    %c6 = arith.constant 6 : index
    %162 = memref.load %arg3[%c6] : memref<8xf32, #tpu.memory_space<smem>>
    %163 = vector.broadcast %160 : vector<1x16x1xf32> to vector<1x16x16xf32>
    %164 = vector.broadcast %161 : vector<1x1x16xf32> to vector<1x16x16xf32>
    %165 = arith.subf %163, %164 : vector<1x16x16xf32>
    %166 = math.absf %165 : vector<1x16x16xf32>
    %167 = vector.broadcast %162 : f32 to vector<1x16x16xf32>
    %168 = arith.mulf %167, %166 : vector<1x16x16xf32>
    %169 = arith.addf %143, %168 : vector<1x16x16xf32>
    %cst_31 = arith.constant dense<0.000000e+00> : vector<1x1xf32>
    %170 = vector.multi_reduction <add>, %161, %cst_31 [2] : vector<1x1x16xf32> to vector<1x1xf32>
    %171 = vector.shape_cast %170 : vector<1x1xf32> to vector<1x1x1xf32>
    %172 = arith.mulf %161, %161 : vector<1x1x16xf32>
    %cst_32 = arith.constant dense<0.000000e+00> : vector<1x1xf32>
    %173 = vector.multi_reduction <add>, %172, %cst_32 [2] : vector<1x1x16xf32> to vector<1x1xf32>
    %174 = vector.shape_cast %173 : vector<1x1xf32> to vector<1x1x1xf32>
    %cst_33 = arith.constant 1.600000e+01 : f32
    %175 = vector.broadcast %cst_33 : f32 to vector<1x1x16xf32>
    %176 = arith.mulf %175, %161 : vector<1x1x16xf32>
    %177 = arith.mulf %176, %161 : vector<1x1x16xf32>
    %cst_34 = arith.constant 2.000000e+00 : f32
    %178 = vector.broadcast %cst_34 : f32 to vector<1x1x16xf32>
    %179 = arith.mulf %178, %161 : vector<1x1x16xf32>
    %180 = vector.broadcast %171 : vector<1x1x1xf32> to vector<1x1x16xf32>
    %181 = arith.mulf %179, %180 : vector<1x1x16xf32>
    %182 = arith.subf %177, %181 : vector<1x1x16xf32>
    %183 = vector.broadcast %174 : vector<1x1x1xf32> to vector<1x1x16xf32>
    %184 = arith.addf %182, %183 : vector<1x1x16xf32>
    %185 = arith.addf %159, %184 : vector<1x1x16xf32>
    %186 = vector.extract_strided_slice %0 {offsets = [0, 0, 7], sizes = [1, 16, 1], strides = [1, 1, 1]} : vector<1x16x8xf32> to vector<1x16x1xf32>
    %187 = vector.extract_strided_slice %1 {offsets = [0, 7, 0], sizes = [1, 1, 16], strides = [1, 1, 1]} : vector<1x8x16xf32> to vector<1x1x16xf32>
    %c7 = arith.constant 7 : index
    %188 = memref.load %arg3[%c7] : memref<8xf32, #tpu.memory_space<smem>>
    %189 = vector.broadcast %186 : vector<1x16x1xf32> to vector<1x16x16xf32>
    %190 = vector.broadcast %187 : vector<1x1x16xf32> to vector<1x16x16xf32>
    %191 = arith.subf %189, %190 : vector<1x16x16xf32>
    %192 = math.absf %191 : vector<1x16x16xf32>
    %193 = vector.broadcast %188 : f32 to vector<1x16x16xf32>
    %194 = arith.mulf %193, %192 : vector<1x16x16xf32>
    %195 = arith.addf %169, %194 : vector<1x16x16xf32>
    %cst_35 = arith.constant dense<0.000000e+00> : vector<1x1xf32>
    %196 = vector.multi_reduction <add>, %187, %cst_35 [2] : vector<1x1x16xf32> to vector<1x1xf32>
    %197 = vector.shape_cast %196 : vector<1x1xf32> to vector<1x1x1xf32>
    %198 = arith.mulf %187, %187 : vector<1x1x16xf32>
    %cst_36 = arith.constant dense<0.000000e+00> : vector<1x1xf32>
    %199 = vector.multi_reduction <add>, %198, %cst_36 [2] : vector<1x1x16xf32> to vector<1x1xf32>
    %200 = vector.shape_cast %199 : vector<1x1xf32> to vector<1x1x1xf32>
    %cst_37 = arith.constant 1.600000e+01 : f32
    %201 = vector.broadcast %cst_37 : f32 to vector<1x1x16xf32>
    %202 = arith.mulf %201, %187 : vector<1x1x16xf32>
    %203 = arith.mulf %202, %187 : vector<1x1x16xf32>
    %cst_38 = arith.constant 2.000000e+00 : f32
    %204 = vector.broadcast %cst_38 : f32 to vector<1x1x16xf32>
    %205 = arith.mulf %204, %187 : vector<1x1x16xf32>
    %206 = vector.broadcast %197 : vector<1x1x1xf32> to vector<1x1x16xf32>
    %207 = arith.mulf %205, %206 : vector<1x1x16xf32>
    %208 = arith.subf %203, %207 : vector<1x1x16xf32>
    %209 = vector.broadcast %200 : vector<1x1x1xf32> to vector<1x1x16xf32>
    %210 = arith.addf %208, %209 : vector<1x1x16xf32>
    %211 = arith.addf %185, %210 : vector<1x1x16xf32>
    %cst_39 = arith.constant 0.000000e+00 : f32
    %212 = vector.broadcast %cst_39 : f32 to vector<1x16x16xf32>
    %213 = arith.maximumf %195, %212 : vector<1x16x16xf32>
    %cst_40 = arith.constant 0.000000e+00 : f32
    %214 = vector.broadcast %cst_40 : f32 to vector<1x16x16xf32>
    %215 = arith.subf %214, %213 : vector<1x16x16xf32>
    %216 = math.exp %215 : vector<1x16x16xf32>
    %cst_41 = arith.constant dense<0.000000e+00> : vector<1x16xf32>
    %217 = vector.multi_reduction <add>, %216, %cst_41 [1] : vector<1x16x16xf32> to vector<1x16xf32>
    %218 = vector.shape_cast %217 : vector<1x16xf32> to vector<1x1x16xf32>
    %219 = tpu.reciprocal %218 : vector<1x1x16xf32> -> vector<1x1x16xf32>
    %220 = vector.broadcast %219 : vector<1x1x16xf32> to vector<1x16x16xf32>
    %221 = arith.mulf %216, %220 : vector<1x16x16xf32>
    %c0_42 = arith.constant 0 : index
    %c0_43 = arith.constant 0 : index
    %c0_44 = arith.constant 0 : index
    %222 = vector.load %arg6[%c0_42, %c0_43, %c0_44] : memref<1x16x16xf32, #tpu.memory_space<vmem>>, vector<1x16x16xf32>
    tpu.vector_store %arg6[%c0_42, %c0_43, %c0_44], %221 {strides = array<i32>} : memref<1x16x16xf32, #tpu.memory_space<vmem>>, vector<1x16x16xf32>,
    %cst_45 = arith.constant dense<0.000000e+00> : vector<1x16xf32>
    %223 = vector.multi_reduction <add>, %221, %cst_45 [1] : vector<1x16x16xf32> to vector<1x16xf32>
    %224 = vector.shape_cast %223 : vector<1x16xf32> to vector<1x1x16xf32>
    %225 = arith.mulf %221, %221 : vector<1x16x16xf32>
    %cst_46 = arith.constant dense<0.000000e+00> : vector<1x16xf32>
    %226 = vector.multi_reduction <add>, %225, %cst_46 [2] : vector<1x16x16xf32> to vector<1x16xf32>
    %227 = vector.shape_cast %226 : vector<1x16xf32> to vector<1x16x1xf32>
    %cst_47 = arith.constant dense<0.000000e+00> : vector<1x1xf32>
    %228 = vector.multi_reduction <add>, %227, %cst_47 [1] : vector<1x16x1xf32> to vector<1x1xf32>
    %229 = vector.shape_cast %228 : vector<1x1xf32> to vector<1x1x1xf32>
    %230 = arith.mulf %224, %211 : vector<1x1x16xf32>
    %cst_48 = arith.constant dense<0.000000e+00> : vector<1x1xf32>
    %231 = vector.multi_reduction <add>, %230, %cst_48 [2] : vector<1x1x16xf32> to vector<1x1xf32>
    %232 = vector.shape_cast %231 : vector<1x1xf32> to vector<1x1x1xf32>
    %233 = tpu.concatenate %229, %232 in 2 : vector<1x1x1xf32>, vector<1x1x1xf32> -> vector<1x1x2xf32>
    %c0_49 = arith.constant 0 : index
    %c0_50 = arith.constant 0 : index
    %c0_51 = arith.constant 0 : index
    %234 = vector.load %arg7[%c0_49, %c0_50, %c0_51] : memref<1x1x2xf32, #tpu.memory_space<vmem>>, vector<1x1x2xf32>
    tpu.vector_store %arg7[%c0_49, %c0_50, %c0_51], %233 {strides = array<i32>} : memref<1x1x2xf32, #tpu.memory_space<vmem>>, vector<1x1x2xf32>,
    %235 = tpu.iota {dimensions = array<i32: 0>} : vector<16x16xi32>
    %236 = tpu.iota {dimensions = array<i32: 1>} : vector<16x16xi32>
    %237 = arith.cmpi eq, %235, %236 : vector<16x16xi32>
    %238 = arith.extui %237 : vector<16x16xi1> to vector<16x16xi32>
    %239 = arith.sitofp %238 : vector<16x16xi32> to vector<16x16xf32>
    %240 = vector.shape_cast %239 : vector<16x16xf32> to vector<1x16x16xf32>
    %241 = vector.broadcast %224 : vector<1x1x16xf32> to vector<1x16x16xf32>
    %242 = arith.mulf %240, %241 : vector<1x16x16xf32>
    %243 = arith.subf %242, %221 : vector<1x16x16xf32>
    %244 = vector.shape_cast %239 : vector<16x16xf32> to vector<1x16x16xf32>
    %245 = arith.subf %243, %244 : vector<1x16x16xf32>
    %246 = vector.shape_cast %0 : vector<1x16x8xf32> to vector<16x8xf32>
    %247 = arith.truncf %246 : vector<16x8xf32> to vector<16x8xbf16>
    %c0_52 = arith.constant 0 : index
    %c0_53 = arith.constant 0 : index
    %c0_54 = arith.constant 0 : index
    %248 = vector.load %arg4[%c0_52, %c0_53, %c0_54] : memref<3x8x32xbf16, #tpu.memory_space<vmem>>, vector<1x8x32xbf16>
    %249 = vector.shape_cast %248 : vector<1x8x32xbf16> to vector<8x32xbf16>
    %cst_55 = arith.constant dense<0.000000e+00> : vector<16x32xf32>
    %250 = tpu.matmul %247, %249, %cst_55 {dimension_numbers = #tpu.dot_dimension_numbers<[1], [0], [0], [1], [0, 0, 1, 1], [], []>} : vector<16x8xbf16>, vector<8x32xbf16>, vector<16x32xf32> -> vector<16x32xf32>
    %251 = vector.shape_cast %250 : vector<16x32xf32> to vector<1x16x32xf32>
    %c1_56 = arith.constant 1 : index
    %c0_57 = arith.constant 0 : index
    %c0_58 = arith.constant 0 : index
    %252 = vector.load %arg4[%c1_56, %c0_57, %c0_58] : memref<3x8x32xbf16, #tpu.memory_space<vmem>>, vector<1x8x32xbf16>
    %253 = vector.shape_cast %252 : vector<1x8x32xbf16> to vector<8x32xbf16>
    %cst_59 = arith.constant dense<0.000000e+00> : vector<16x32xf32>
    %254 = tpu.matmul %247, %253, %cst_59 {dimension_numbers = #tpu.dot_dimension_numbers<[1], [0], [0], [1], [0, 0, 1, 1], [], []>} : vector<16x8xbf16>, vector<8x32xbf16>, vector<16x32xf32> -> vector<16x32xf32>
    %255 = vector.shape_cast %254 : vector<16x32xf32> to vector<1x16x32xf32>
    %c2_60 = arith.constant 2 : index
    %c0_61 = arith.constant 0 : index
    %c0_62 = arith.constant 0 : index
    %256 = vector.load %arg4[%c2_60, %c0_61, %c0_62] : memref<3x8x32xbf16, #tpu.memory_space<vmem>>, vector<1x8x32xbf16>
    %257 = vector.shape_cast %256 : vector<1x8x32xbf16> to vector<8x32xbf16>
    %cst_63 = arith.constant dense<0.000000e+00> : vector<16x32xf32>
    %258 = tpu.matmul %247, %257, %cst_63 {dimension_numbers = #tpu.dot_dimension_numbers<[1], [0], [0], [1], [0, 0, 1, 1], [], []>} : vector<16x8xbf16>, vector<8x32xbf16>, vector<16x32xf32> -> vector<16x32xf32>
    %259 = vector.shape_cast %258 : vector<16x32xf32> to vector<1x16x32xf32>
    %260 = vector.shape_cast %239 : vector<16x16xf32> to vector<1x16x16xf32>
    %cst_64 = arith.constant 2.000000e+00 : f32
    %261 = vector.broadcast %cst_64 : f32 to vector<1x16x16xf32>
    %262 = arith.mulf %261, %245 : vector<1x16x16xf32>
    %263 = arith.mulf %262, %245 : vector<1x16x16xf32>
    %264 = arith.subf %263, %260 : vector<1x16x16xf32>
    %265 = tpu.concatenate %245, %264 in 2 : vector<1x16x16xf32>, vector<1x16x16xf32> -> vector<1x16x32xf32>
    %266 = tpu.concatenate %255, %259 in 1 : vector<1x16x32xf32>, vector<1x16x32xf32> -> vector<1x32x32xf32>
    %267 = arith.truncf %265 : vector<1x16x32xf32> to vector<1x16x32xbf16>
    %268 = arith.truncf %266 : vector<1x32x32xf32> to vector<1x32x32xbf16>
    %cst_65 = arith.constant dense<0.000000e+00> : vector<1x16x32xf32>
    %269 = tpu.matmul %267, %268, %cst_65 {dimension_numbers = #tpu.dot_dimension_numbers<[2], [1], [1], [2], [0, 0, 0, 1, 1, 2], [0], [0]>} : vector<1x16x32xbf16>, vector<1x32x32xbf16>, vector<1x16x32xf32> -> vector<1x16x32xf32>
    %270 = arith.addf %251, %269 : vector<1x16x32xf32>
    %cst_66 = arith.constant 0.000000e+00 : f32
    %271 = vector.broadcast %cst_66 : f32 to vector<1x16x32xf32>
    %272 = arith.maximumf %270, %271 : vector<1x16x32xf32>
    %c0_67 = arith.constant 0 : index
    %c0_68 = arith.constant 0 : index
    %c0_69 = arith.constant 0 : index
    %273 = vector.load %arg5[%c0_67, %c0_68, %c0_69] : memref<1x16x32xf32, #tpu.memory_space<vmem>>, vector<1x16x32xf32>
    tpu.vector_store %arg5[%c0_67, %c0_68, %c0_69], %272 {strides = array<i32>} : memref<1x16x32xf32, #tpu.memory_space<vmem>>, vector<1x16x32xf32>,
    return
  }
  func.func @transform_0(%arg0: i32) -> (i32, i32, i32) {
    %c0_i32 = arith.constant 0 : i32
    %c0_i32_0 = arith.constant 0 : i32
    %c0_i32_1 = arith.constant 0 : i32
    return %arg0, %c0_i32, %c0_i32_0 : i32, i32, i32
  }
  func.func @transform_1(%arg0: i32) -> (i32, i32, i32) {
    %c0_i32 = arith.constant 0 : i32
    %c0_i32_0 = arith.constant 0 : i32
    %c0_i32_1 = arith.constant 0 : i32
    return %arg0, %c0_i32, %c0_i32_0 : i32, i32, i32
  }
  func.func @transform_2(%arg0: i32) -> i32 {
    %c0_i32 = arith.constant 0 : i32
    %c0_i32_0 = arith.constant 0 : i32
    return %c0_i32 : i32
  }
  func.func @transform_3(%arg0: i32) -> (i32, i32, i32) {
    %c0_i32 = arith.constant 0 : i32
    %c0_i32_0 = arith.constant 0 : i32
    %c0_i32_1 = arith.constant 0 : i32
    %c0_i32_2 = arith.constant 0 : i32
    return %c0_i32, %c0_i32_0, %c0_i32_1 : i32, i32, i32
  }
  func.func @transform_4(%arg0: i32) -> (i32, i32, i32) {
    %c0_i32 = arith.constant 0 : i32
    %c0_i32_0 = arith.constant 0 : i32
    %c0_i32_1 = arith.constant 0 : i32
    return %arg0, %c0_i32, %c0_i32_0 : i32, i32, i32
  }
  func.func @transform_5(%arg0: i32) -> (i32, i32, i32) {
    %c0_i32 = arith.constant 0 : i32
    %c0_i32_0 = arith.constant 0 : i32
    %c0_i32_1 = arith.constant 0 : i32
    return %arg0, %c0_i32, %c0_i32_0 : i32, i32, i32
  }
  func.func @transform_6(%arg0: i32) -> (i32, i32, i32) {
    %c0_i32 = arith.constant 0 : i32
    %c0_i32_0 = arith.constant 0 : i32
    %c0_i32_1 = arith.constant 0 : i32
    return %arg0, %c0_i32, %c0_i32_0 : i32, i32, i32
  }
}

</mosaic_0001>

<llo_original>
// kernel: _lambda_.1
$region0: #{_lambda_.1}
  #allocation0 [shape = 'u32[]', space=smem, size = 0x4, offset = 0x4, fixed_abs, tag = 'smem constant byte address 0x4 - core index']
  #allocation1 [shape = 'u32[144,128]{1,0:T(1,128)}', space=vmem, size = 0x12000, scoped, tag = 'internal scratch']
  %s0 = inlined_call_operand.vmem [shape: f32[2,16,8], index: 0, kind: input, shape index: {}]
  %s1 = inlined_call_operand.vmem [shape: f32[2,8,16], index: 1, kind: input, shape index: {}]
  %s2 = inlined_call_operand.vmem [shape: f32[8], index: 2, kind: input, shape index: {}]
  %s3 = inlined_call_operand.vmem [shape: bf16[3,8,32], index: 3, kind: input, shape index: {}]
  %s4 = inlined_call_operand.hbm [shape: f32[2,16,32], index: 4, kind: output, shape index: {0}]
  %s5 = inlined_call_operand.hbm [shape: f32[2,16,16], index: 5, kind: output, shape index: {1}]
  %s6 = inlined_call_operand.vmem [shape: f32[2,1,2], index: 6, kind: output, shape index: {2}]
  %7 = xla_tuple %s4, %s5, %s6
  %s8 = sld [smem:[#allocation0]]
  $region69: #{_lambda_.1} parent=0
    _
  %s10 = ssub.s32 1, %s8
  %s11 = scalar_select 0, %s10, %s8
  $region1: #{_lambda_.1} parent=0
    #allocation2 [shape = 'u8[512]{0}', space=smem, size = 0x200, scoped, tag = 'input window, operand 2, single buffered']
    #allocation3 [shape = 's32[2]{0}', space=sflag, size = 0x8, scoped, tag = 'scoped memory for _lambda_.1']
    #allocation4 [shape = 's32[2]{0}', space=sflag, size = 0x8, scoped, tag = 'scoped memory for _lambda_.1']
    #allocation5 [shape = 'u8[16384]{0}', space=vmem, size = 0x4000, scoped, tag = 'output window, operand 0']
    #allocation6 [shape = 'u8[16384]{0}', space=vmem, size = 0x4000, scoped, tag = 'output window, operand 1']
    #allocation7 [shape = 's32[2]{0}', space=sflag, size = 0x8, scoped, tag = 'scoped memory for _lambda_.1']
    %12 = vsyncpa [#allocation4], 0
    %13 = vsyncpa [#allocation3], 0
    %s14 = scalar_lea.sflag [#allocation3], 1
    %15 = vsyncpa %s14, 0
    %16 = vsyncpa [#allocation7], 0
    %s17 = scalar_lea.sflag [#allocation7], 1
    %18 = vsyncpa %s17, 0
    loop: start=0, step=1, limit=4
    $region2: #{_lambda_.1} parent=1 // loop_pre_header
      _
    $region3: #{_lambda_.1} parent=1 // loop_header
      %s20 = sphi 0, %s24
      %p21 = scmp.ge.s32.totalorder %s20, 4
      %s30 = sphi 0, %s32
      %s33 = sphi 0, %s30
      %s34 = sphi 0, %s33
      %s50 = sphi 0, %s34
      %s56 = sphi 0, %s58
      %s59 = sphi 0, %s56
      %s60 = sphi 0, %s59
      %s76 = sphi 0, %s60
      %s80 = sphi 0, %s80
      %s82 = sphi 0, %s80
      %s83 = sphi 0, %s82
      %s97 = sphi 0, %s83
      %s101 = sphi 0, %s101
      %s103 = sphi 0, %s101
      %s104 = sphi 0, %s103
      %s118 = sphi 0, %s104
      %s124 = sphi 0, %s126
      %s127 = sphi 0, %s124
      %s128 = sphi 0, %s127
      %s144 = sphi 0, %s128
      %s150 = sphi 0, %s152
      %s153 = sphi 0, %s150
      %s154 = sphi 0, %s153
      %s170 = sphi 0, %s154
      %s176 = sphi 0, %s178
      %s179 = sphi 0, %s176
      %s180 = sphi 0, %s179
      %s196 = sphi 0, %s180
    $region4: #{_lambda_.1} parent=1 // loop_header_branch
      %23 = sbr.rel (%p21) target = $region8
    $region5: #{_lambda_.1} parent=1 // loop_body
      %s25 = ssub.s32 %s20, 1
      %s26 = ssub.s32 %s20, 2
      %s27 = sadd.s32 %s20, 1
      %s28 = ssub.s32 %s20, %s27
      %p29 = scmp.eq.s32.totalorder %s28, 0
      %s31 = sadd.s32 %s30, 1
      %s32 = scalar_select %p29, %s30, %s31
      %p35 = pneg %p29
      %p36 = scmp.eq.s32.totalorder %s20, 1
      %p37 = por %p35, %p36
      %p38 = scmp.ne.s32.totalorder %s30, %s33
      %p39 = scmp.eq.s32.totalorder %s20, 0
      %p40 = por %p38, %p39
      %p41 = scmp.ne.s32.totalorder %s30, %s33
      %p42 = scmp.eq.s32.totalorder %s25, 1
      %p43 = por %p41, %p42
      %p44 = scmp.ne.s32.totalorder %s33, %s34
      %p45 = scmp.eq.s32.totalorder %s25, 0
      %p46 = por %p44, %p45
      %p47 = scmp.ne.s32.totalorder %s33, %s34
      %p48 = scmp.eq.s32.totalorder %s26, 1
      %p49 = por %p47, %p48
      %p51 = scmp.ne.s32.totalorder %s34, %s50
      %p52 = scmp.eq.s32.totalorder %s26, 0
      %p53 = por %p51, %p52
      %s54 = ssub.s32 %s20, %s27
      %p55 = scmp.eq.s32.totalorder %s54, 0
      %s57 = sadd.s32 %s56, 1
      %s58 = scalar_select %p55, %s56, %s57
      %p61 = pneg %p55
      %p62 = scmp.eq.s32.totalorder %s20, 1
      %p63 = por %p61, %p62
      %p64 = scmp.ne.s32.totalorder %s56, %s59
      %p65 = scmp.eq.s32.totalorder %s20, 0
      %p66 = por %p64, %p65
      %p67 = scmp.ne.s32.totalorder %s56, %s59
      %p68 = scmp.eq.s32.totalorder %s25, 1
      %p69 = por %p67, %p68
      %p70 = scmp.ne.s32.totalorder %s59, %s60
      %p71 = scmp.eq.s32.totalorder %s25, 0
      %p72 = por %p70, %p71
      %p73 = scmp.ne.s32.totalorder %s59, %s60
      %p74 = scmp.eq.s32.totalorder %s26, 1
      %p75 = por %p73, %p74
      %p77 = scmp.ne.s32.totalorder %s60, %s76
      %p78 = scmp.eq.s32.totalorder %s26, 0
      %p79 = por %p77, %p78
      %s81 = sadd.s32 %s80, 1
      %p84 = scmp.eq.s32.totalorder %s20, 1
      %p85 = scmp.ne.s32.totalorder %s80, %s82
      %p86 = scmp.eq.s32.totalorder %s20, 0
      %p87 = por %p85, %p86
      %p88 = scmp.ne.s32.totalorder %s80, %s82
      %p89 = scmp.eq.s32.totalorder %s25, 1
      %p90 = por %p88, %p89
      %p91 = scmp.ne.s32.totalorder %s82, %s83
      %p92 = scmp.eq.s32.totalorder %s25, 0
      %p93 = por %p91, %p92
      %p94 = scmp.ne.s32.totalorder %s82, %s83
      %p95 = scmp.eq.s32.totalorder %s26, 1
      %p96 = por %p94, %p95
      %p98 = scmp.ne.s32.totalorder %s83, %s97
      %p99 = scmp.eq.s32.totalorder %s26, 0
      %p100 = por %p98, %p99
      %s102 = sadd.s32 %s101, 1
      %p105 = scmp.eq.s32.totalorder %s20, 1
      %p106 = scmp.ne.s32.totalorder %s101, %s103
      %p107 = scmp.eq.s32.totalorder %s20, 0
      %p108 = por %p106, %p107
      %p109 = scmp.ne.s32.totalorder %s101, %s103
      %p110 = scmp.eq.s32.totalorder %s25, 1
      %p111 = por %p109, %p110
      %p112 = scmp.ne.s32.totalorder %s103, %s104
      %p113 = scmp.eq.s32.totalorder %s25, 0
      %p114 = por %p112, %p113
      %p115 = scmp.ne.s32.totalorder %s103, %s104
      %p116 = scmp.eq.s32.totalorder %s26, 1
      %p117 = por %p115, %p116
      %p119 = scmp.ne.s32.totalorder %s104, %s118
      %p120 = scmp.eq.s32.totalorder %s26, 0
      %p121 = por %p119, %p120
      %s122 = ssub.s32 %s20, %s27
      %p123 = scmp.eq.s32.totalorder %s122, 0
      %s125 = sadd.s32 %s124, 1
      %s126 = scalar_select %p123, %s124, %s125
      %p129 = pneg %p123
      %p130 = scmp.eq.s32.totalorder %s20, 1
      %p131 = por %p129, %p130
      %p132 = scmp.ne.s32.totalorder %s124, %s127
      %p133 = scmp.eq.s32.totalorder %s20, 0
      %p134 = por %p132, %p133
      %p135 = scmp.ne.s32.totalorder %s124, %s127
      %p136 = scmp.eq.s32.totalorder %s25, 1
      %p137 = por %p135, %p136
      %p138 = scmp.ne.s32.totalorder %s127, %s128
      %p139 = scmp.eq.s32.totalorder %s25, 0
      %p140 = por %p138, %p139
      %p141 = scmp.ne.s32.totalorder %s127, %s128
      %p142 = scmp.eq.s32.totalorder %s26, 1
      %p143 = por %p141, %p142
      %p145 = scmp.ne.s32.totalorder %s128, %s144
      %p146 = scmp.eq.s32.totalorder %s26, 0
      %p147 = por %p145, %p146
      %s148 = ssub.s32 %s20, %s27
      %p149 = scmp.eq.s32.totalorder %s148, 0
      %s151 = sadd.s32 %s150, 1
      %s152 = scalar_select %p149, %s150, %s151
      %p155 = pneg %p149
      %p156 = scmp.eq.s32.totalorder %s20, 1
      %p157 = por %p155, %p156
      %p158 = scmp.ne.s32.totalorder %s150, %s153
      %p159 = scmp.eq.s32.totalorder %s20, 0
      %p160 = por %p158, %p159
      %p161 = scmp.ne.s32.totalorder %s150, %s153
      %p162 = scmp.eq.s32.totalorder %s25, 1
      %p163 = por %p161, %p162
      %p164 = scmp.ne.s32.totalorder %s153, %s154
      %p165 = scmp.eq.s32.totalorder %s25, 0
      %p166 = por %p164, %p165
      %p167 = scmp.ne.s32.totalorder %s153, %s154
      %p168 = scmp.eq.s32.totalorder %s26, 1
      %p169 = por %p167, %p168
      %p171 = scmp.ne.s32.totalorder %s154, %s170
      %p172 = scmp.eq.s32.totalorder %s26, 0
      %p173 = por %p171, %p172
      %s174 = ssub.s32 %s20, %s27
      %p175 = scmp.eq.s32.totalorder %s174, 0
      %s177 = sadd.s32 %s176, 1
      %s178 = scalar_select %p175, %s176, %s177
      %p181 = pneg %p175
      %p182 = scmp.eq.s32.totalorder %s20, 1
      %p183 = por %p181, %p182
      %p184 = scmp.ne.s32.totalorder %s176, %s179
      %p185 = scmp.eq.s32.totalorder %s20, 0
      %p186 = por %p184, %p185
      %p187 = scmp.ne.s32.totalorder %s176, %s179
      %p188 = scmp.eq.s32.totalorder %s25, 1
      %p189 = por %p187, %p188
      %p190 = scmp.ne.s32.totalorder %s179, %s180
      %p191 = scmp.eq.s32.totalorder %s25, 0
      %p192 = por %p190, %p191
      %p193 = scmp.ne.s32.totalorder %s179, %s180
      %p194 = scmp.eq.s32.totalorder %s26, 1
      %p195 = por %p193, %p194
      %p197 = scmp.ne.s32.totalorder %s180, %s196
      %p198 = scmp.eq.s32.totalorder %s26, 0
      %p199 = por %p197, %p198
      %p200 = scmp.le.s32.totalorder 1, %s20
      %p201 = scmp.lt.s32.totalorder %s20, 3
      %p202 = pnand %p200, %p201
      %p203 = pneg %p202
      // Predicated region
      $region9: #{_lambda_.1} parent=5 // pred_check
        _
      $region10: #{_lambda_.1} parent=5 // pred_check_branch
        %205 = sbr.rel (%p202) target = $region12
      $region11: #{_lambda_.1} parent=5 // pred_region
        %s206 = ssub.s32 %s20, 1
        // Predicated region
        $region13: #{_lambda_.1} parent=11 // pred_check
          %p207 = pneg %p93
        $region14: #{_lambda_.1} parent=11 // pred_check_branch
          %209 = sbr.rel (%p207) target = $region16
        $region15: #{_lambda_.1} parent=11 // pred_region
          %s211 = ssub.s32 16, 16
          %212 = vsyncadd [#allocation4], %s211
          %s214 = sshll.u32 %s2, 4
          %s215 = int_to_ptr.vmem [resolvable:$true] %s214
          %217 = dma.vmem_to_smem %s215, 16, [#allocation2], [#allocation4]
        $region16: #{_lambda_.1} parent=11 // pred_fallthru
          _
        // Predicated region
        $region17: #{_lambda_.1} parent=11 // pred_check
          %p218 = pneg %p114
        $region18: #{_lambda_.1} parent=11 // pred_check_branch
          %220 = sbr.rel (%p218) target = $region20
        $region19: #{_lambda_.1} parent=11 // pred_region
          _
        $region20: #{_lambda_.1} parent=11 // pred_fallthru
          _
      $region12: #{_lambda_.1} parent=5 // pred_fallthru
        _
      %p221 = scmp.lt.s32.totalorder %s20, 2
      // Predicated region
      $region21: #{_lambda_.1} parent=5 // pred_check
        %p222 = pneg %p221
      $region22: #{_lambda_.1} parent=5 // pred_check_branch
        %224 = sbr.rel (%p222) target = $region24
      $region23: #{_lambda_.1} parent=5 // pred_region
        // Predicated region
        $region25: #{_lambda_.1} parent=23 // pred_check
          %p225 = pneg %p40
        $region26: #{_lambda_.1} parent=23 // pred_check_branch
          %227 = sbr.rel (%p225) target = $region28
        $region27: #{_lambda_.1} parent=23 // pred_region
          %p228 = scmp.lt.s32.totalorder %s20, 1
          %s229 = scalar_select %p228, %s20, 1
          %s230 = smul.addr %s229, 2
          %s231 = smul.addr %s230, 8
          %s232 = scalar_lea.vmem %s0, %s231
        $region28: #{_lambda_.1} parent=23 // pred_fallthru
          _
        // Predicated region
        $region29: #{_lambda_.1} parent=23 // pred_check
          %p233 = pneg %p66
        $region30: #{_lambda_.1} parent=23 // pred_check_branch
          %235 = sbr.rel (%p233) target = $region32
        $region31: #{_lambda_.1} parent=23 // pred_region
          %p236 = scmp.lt.s32.totalorder %s20, 1
          %s237 = scalar_select %p236, %s20, 1
          %s238 = smul.addr %s237, 8
          %s239 = scalar_lea.vmem %s1, %s238
        $region32: #{_lambda_.1} parent=23 // pred_fallthru
          _
      $region24: #{_lambda_.1} parent=5 // pred_fallthru
        _
      %p240 = scmp.le.s32.totalorder 1, %s20
      %p241 = scmp.lt.s32.totalorder %s20, 3
      %p242 = pnand %p240, %p241
      %p243 = pneg %p242
      // Predicated region
      $region33: #{_lambda_.1} parent=5 // pred_check
        _
      $region34: #{_lambda_.1} parent=5 // pred_check_branch
        %245 = sbr.rel (%p242) target = $region36
      $region35: #{_lambda_.1} parent=5 // pred_region
        %s246 = ssub.s32 %s20, 1
        // Predicated region
        $region37: #{_lambda_.1} parent=35 // pred_check
          %p247 = pneg %p93
        $region38: #{_lambda_.1} parent=35 // pred_check_branch
          %249 = sbr.rel (%p247) target = $region40
        $region39: #{_lambda_.1} parent=35 // pred_region
          %250 = dma.done [#allocation4], 16
        $region40: #{_lambda_.1} parent=35 // pred_fallthru
          _
        %251 = sfence
        %p252 = scmp.lt.s32.totalorder %s25, 1
        %s253 = scalar_select %p252, %s25, 1
        %s254 = smul.addr %s253, 2
        %s255 = smul.addr %s254, 8
        %s256 = scalar_lea.vmem %s0, %s255
        %p257 = pneg %p46
        %p258 = pneg %p43
        %p259 = scmp.lt.s32.totalorder %s25, 1
        %s260 = scalar_select %p259, %s25, 1
        %s261 = smul.addr %s260, 8
        %s262 = scalar_lea.vmem %s1, %s261
        %p263 = pneg %p72
        %p264 = pneg %p69
        %p265 = pneg %p93
        %p266 = pneg %p90
        %p267 = pneg %p114
        %p268 = pneg %p111
        %p269 = pneg %p140
        %p270 = pneg %p137
        %s271 = sand.u32 %s127, 1
        %s272 = scalar_lea.sflag [#allocation3], %s271
        %s273 = sand.u32 %s127, 1
        %s274 = smul.addr %s273, 16
        %s275 = scalar_lea.vmem [#allocation5], %s274
        %p276 = pneg %p166
        %p277 = pneg %p163
        %s278 = sand.u32 %s153, 1
        %s279 = scalar_lea.sflag [#allocation7], %s278
        %s280 = sand.u32 %s153, 1
        %s281 = smul.addr %s280, 16
        %s282 = scalar_lea.vmem [#allocation6], %s281
        %p283 = pneg %p192
        %p284 = pneg %p189
        %p285 = scmp.lt.s32.totalorder %s25, 1
        %s286 = scalar_select %p285, %s25, 1
        %s287 = scalar_lea.vmem %s6, %s286
        %p288 = scmp.lt.s32.totalorder %s25, 1
        %s289 = scalar_select %p288, %s25, 1
        %s290 = smul.addr %s289, 2
        %s291 = smul.addr %s290, 8
        %s292 = scalar_lea.vmem %s0, %s291
        %p293 = scmp.lt.s32.totalorder %s25, 1
        %s294 = scalar_select %p293, %s25, 1
        %s295 = smul.addr %s294, 8
        %s296 = scalar_lea.vmem %s1, %s295
        %p297 = scmp.lt.s32.totalorder %s25, 1
        %s298 = scalar_select %p297, %s25, 1
        %s299 = scalar_lea.vmem %s6, %s298
        %v301 = vld [vmem:[%s292] sm:$0xff]
        %v302 = vld [vmem:[%s292 + $0x8] sm:$0xff]
        %v303 = vld [vmem:[%s296] sm:$0xff]
        %s304 = sld [smem:[#allocation2]]
        %306 = vset.pattern.permute.xlu0 0
        %307 = vperm.xlu0 %306, %v301
        %v308 = vpop.permute.xlu0 %307
        %311 = vset.pattern.permute.xlu0 0
        %312 = vperm.xlu0 %311, %v302
        %v313 = vpop.permute.xlu0 %312
        %v315 = vlaneseq
        %v316 = vshrl.u32 %v315, 7
        %v317 = vsub.s32 0, %v316
        %v318 = vrot.slane %v303, %v317
        %v319 = vsub.f32 %v308, %v318
        %v320 = vsub.f32 %v313, %v318
        %v321 = vand.u32 2147483647, %v319
        %v322 = vand.u32 2147483647, %v320
        %v323 = vstv %s304
        %v324 = vmul.f32 %v323, %v321
        %v325 = vmul.f32 %v323, %v322
        %v326 = vadd.f32 %v324, 0.0
        %v327 = vadd.f32 %v325, 0.0
        %vm328 = vcmask 122880
        %v329 = vsel %vm328, %v303, 0.0
        %330 = vadd.xlane.f32.xlu0 %v329
        %v331 = vpop.xlane.xlu0 %330
        %v332 = vmul.f32 %v303, %v303
        %v333 = vsel %vm328, %v332, 0.0
        %334 = vadd.xlane.f32.xlu0 %v333
        %v335 = vpop.xlane.xlu0 %334
        %v336 = vmul.f32 %v303, 16.0
        %v337 = vmul.f32 %v336, %v303
        %v338 = vmul.f32 %v303, 2.0
        %v339 = vmul.f32 %v338, %v331
        %v340 = vsub.f32 %v337, %v339
        %v341 = vadd.f32 %v340, %v335
        %v342 = vadd.f32 %v341, 0.0
        %s343 = sld [smem:[#allocation2 + $0x1]]
        %344 = vset.pattern.permute.xlu0 1
        %345 = vperm.xlu0 %344, %v301
        %v346 = vpop.permute.xlu0 %345
        %348 = vset.pattern.permute.xlu0 1
        %349 = vperm.xlu0 %348, %v302
        %v350 = vpop.permute.xlu0 %349
        %v352 = vlaneseq
        %v353 = vshrl.u32 %v352, 7
        %v354 = vsub.s32 1, %v353
        %v355 = vrot.slane %v303, %v354
        %v356 = vsub.f32 %v346, %v355
        %v357 = vsub.f32 %v350, %v355
        %v358 = vand.u32 2147483647, %v356
        %v359 = vand.u32 2147483647, %v357
        %v360 = vstv %s343
        %v361 = vmul.f32 %v360, %v358
        %v362 = vmul.f32 %v360, %v359
        %v363 = vadd.f32 %v326, %v361
        %v364 = vadd.f32 %v327, %v362
        %vm365 = vcmask 123905
        %v366 = vsel %vm365, %v303, 0.0
        %367 = vadd.xlane.f32.xlu0 %v366
        %v368 = vpop.xlane.xlu0 %367
        %v369 = vsel %vm365, %v332, 0.0
        %370 = vadd.xlane.f32.xlu0 %v369
        %v371 = vpop.xlane.xlu0 %370
        %v372 = vmul.f32 %v338, %v368
        %v373 = vsub.f32 %v337, %v372
        %v374 = vadd.f32 %v373, %v371
        %v376 = vrot.slane %v374, 1
        %v378 = vadd.f32 %v342, %v376
        %s379 = sld [smem:[#allocation2 + $0x2]]
        %380 = vset.pattern.permute.xlu0 2
        %381 = vperm.xlu0 %380, %v301
        %v382 = vpop.permute.xlu0 %381
        %384 = vset.pattern.permute.xlu0 2
        %385 = vperm.xlu0 %384, %v302
        %v386 = vpop.permute.xlu0 %385
        %v388 = vlaneseq
        %v389 = vshrl.u32 %v388, 7
        %v390 = vsub.s32 2, %v389
        %v391 = vrot.slane %v303, %v390
        %v392 = vsub.f32 %v382, %v391
        %v393 = vsub.f32 %v386, %v391
        %v394 = vand.u32 2147483647, %v392
        %v395 = vand.u32 2147483647, %v393
        %v396 = vstv %s379
        %v397 = vmul.f32 %v396, %v394
        %v398 = vmul.f32 %v396, %v395
        %v399 = vadd.f32 %v363, %v397
        %v400 = vadd.f32 %v364, %v398
        %vm401 = vcmask 124930
        %v402 = vsel %vm401, %v303, 0.0
        %403 = vadd.xlane.f32.xlu0 %v402
        %v404 = vpop.xlane.xlu0 %403
        %v405 = vsel %vm401, %v332, 0.0
        %406 = vadd.xlane.f32.xlu0 %v405
        %v407 = vpop.xlane.xlu0 %406
        %v408 = vmul.f32 %v338, %v404
        %v409 = vsub.f32 %v337, %v408
        %v410 = vadd.f32 %v409, %v407
        %v412 = vrot.slane %v410, 2
        %v414 = vadd.f32 %v378, %v412
        %s415 = sld [smem:[#allocation2 + $0x3]]
        %416 = vset.pattern.permute.xlu0 3
        %417 = vperm.xlu0 %416, %v301
        %v418 = vpop.permute.xlu0 %417
        %420 = vset.pattern.permute.xlu0 3
        %421 = vperm.xlu0 %420, %v302
        %v422 = vpop.permute.xlu0 %421
        %v424 = vlaneseq
        %v425 = vshrl.u32 %v424, 7
        %v426 = vsub.s32 3, %v425
        %v427 = vrot.slane %v303, %v426
        %v428 = vsub.f32 %v418, %v427
        %v429 = vsub.f32 %v422, %v427
        %v430 = vand.u32 2147483647, %v428
        %v431 = vand.u32 2147483647, %v429
        %v432 = vstv %s415
        %v433 = vmul.f32 %v432, %v430
        %v434 = vmul.f32 %v432, %v431
        %v435 = vadd.f32 %v399, %v433
        %v436 = vadd.f32 %v400, %v434
        %vm437 = vcmask 125955
        %v438 = vsel %vm437, %v303, 0.0
        %439 = vadd.xlane.f32.xlu0 %v438
        %v440 = vpop.xlane.xlu0 %439
        %v441 = vsel %vm437, %v332, 0.0
        %442 = vadd.xlane.f32.xlu0 %v441
        %v443 = vpop.xlane.xlu0 %442
        %v444 = vmul.f32 %v338, %v440
        %v445 = vsub.f32 %v337, %v444
        %v446 = vadd.f32 %v445, %v443
        %v448 = vrot.slane %v446, 3
        %v450 = vadd.f32 %v414, %v448
        %s451 = sld [smem:[#allocation2 + $0x4]]
        %452 = vset.pattern.permute.xlu0 4
        %453 = vperm.xlu0 %452, %v301
        %v454 = vpop.permute.xlu0 %453
        %456 = vset.pattern.permute.xlu0 4
        %457 = vperm.xlu0 %456, %v302
        %v458 = vpop.permute.xlu0 %457
        %v460 = vlaneseq
        %v461 = vshrl.u32 %v460, 7
        %v462 = vsub.s32 4, %v461
        %v463 = vrot.slane %v303, %v462
        %v464 = vsub.f32 %v454, %v463
        %v465 = vsub.f32 %v458, %v463
        %v466 = vand.u32 2147483647, %v464
        %v467 = vand.u32 2147483647, %v465
        %v468 = vstv %s451
        %v469 = vmul.f32 %v468, %v466
        %v470 = vmul.f32 %v468, %v467
        %v471 = vadd.f32 %v435, %v469
        %v472 = vadd.f32 %v436, %v470
        %vm473 = vcmask 126980
        %v474 = vsel %vm473, %v303, 0.0
        %475 = vadd.xlane.f32.xlu0 %v474
        %v476 = vpop.xlane.xlu0 %475
        %v477 = vsel %vm473, %v332, 0.0
        %478 = vadd.xlane.f32.xlu0 %v477
        %v479 = vpop.xlane.xlu0 %478
        %v480 = vmul.f32 %v338, %v476
        %v481 = vsub.f32 %v337, %v480
        %v482 = vadd.f32 %v481, %v479
        %v484 = vrot.slane %v482, 4
        %v486 = vadd.f32 %v450, %v484
        %s487 = sld [smem:[#allocation2 + $0x5]]
        %488 = vset.pattern.permute.xlu0 5
        %489 = vperm.xlu0 %488, %v301
        %v490 = vpop.permute.xlu0 %489
        %492 = vset.pattern.permute.xlu0 5
        %493 = vperm.xlu0 %492, %v302
        %v494 = vpop.permute.xlu0 %493
        %v496 = vlaneseq
        %v497 = vshrl.u32 %v496, 7
        %v498 = vsub.s32 5, %v497
        %v499 = vrot.slane %v303, %v498
        %v500 = vsub.f32 %v490, %v499
        %v501 = vsub.f32 %v494, %v499
        %v502 = vand.u32 2147483647, %v500
        %v503 = vand.u32 2147483647, %v501
        %v504 = vstv %s487
        %v505 = vmul.f32 %v504, %v502
        %v506 = vmul.f32 %v504, %v503
        %v507 = vadd.f32 %v471, %v505
        %v508 = vadd.f32 %v472, %v506
        %vm509 = vcmask 128005
        %v510 = vsel %vm509, %v303, 0.0
        %511 = vadd.xlane.f32.xlu0 %v510
        %v512 = vpop.xlane.xlu0 %511
        %v513 = vsel %vm509, %v332, 0.0
        %514 = vadd.xlane.f32.xlu0 %v513
        %v515 = vpop.xlane.xlu0 %514
        %v516 = vmul.f32 %v338, %v512
        %v517 = vsub.f32 %v337, %v516
        %v518 = vadd.f32 %v517, %v515
        %v520 = vrot.slane %v518, 5
        %v522 = vadd.f32 %v486, %v520
        %s523 = sld [smem:[#allocation2 + $0x6]]
        %524 = vset.pattern.permute.xlu0 6
        %525 = vperm.xlu0 %524, %v301
        %v526 = vpop.permute.xlu0 %525
        %528 = vset.pattern.permute.xlu0 6
        %529 = vperm.xlu0 %528, %v302
        %v530 = vpop.permute.xlu0 %529
        %v532 = vlaneseq
        %v533 = vshrl.u32 %v532, 7
        %v534 = vsub.s32 6, %v533
        %v535 = vrot.slane %v303, %v534
        %v536 = vsub.f32 %v526, %v535
        %v537 = vsub.f32 %v530, %v535
        %v538 = vand.u32 2147483647, %v536
        %v539 = vand.u32 2147483647, %v537
        %v540 = vstv %s523
        %v541 = vmul.f32 %v540, %v538
        %v542 = vmul.f32 %v540, %v539
        %v543 = vadd.f32 %v507, %v541
        %v544 = vadd.f32 %v508, %v542
        %vm545 = vcmask 129030
        %v546 = vsel %vm545, %v303, 0.0
        %547 = vadd.xlane.f32.xlu0 %v546
        %v548 = vpop.xlane.xlu0 %547
        %v549 = vsel %vm545, %v332, 0.0
        %550 = vadd.xlane.f32.xlu0 %v549
        %v551 = vpop.xlane.xlu0 %550
        %v552 = vmul.f32 %v338, %v548
        %v553 = vsub.f32 %v337, %v552
        %v554 = vadd.f32 %v553, %v551
        %v556 = vrot.slane %v554, 6
        %v558 = vadd.f32 %v522, %v556
        %s559 = sld [smem:[#allocation2 + $0x7]]
        %560 = vset.pattern.permute.xlu0 7
        %561 = vperm.xlu0 %560, %v301
        %v562 = vpop.permute.xlu0 %561
        %564 = vset.pattern.permute.xlu0 7
        %565 = vperm.xlu0 %564, %v302
        %v566 = vpop.permute.xlu0 %565
        %v568 = vlaneseq
        %v569 = vshrl.u32 %v568, 7
        %v570 = vsub.s32 7, %v569
        %v571 = vrot.slane %v303, %v570
        %v572 = vsub.f32 %v562, %v571
        %v573 = vsub.f32 %v566, %v571
        %v574 = vand.u32 2147483647, %v572
        %v575 = vand.u32 2147483647, %v573
        %v576 = vstv %s559
        %v577 = vmul.f32 %v576, %v574
        %v578 = vmul.f32 %v576, %v575
        %v579 = vadd.f32 %v543, %v577
        %v580 = vadd.f32 %v544, %v578
        %vm581 = vcmask 130055
        %v582 = vsel %vm581, %v303, 0.0
        %583 = vadd.xlane.f32.xlu0 %v582
        %v584 = vpop.xlane.xlu0 %583
        %v585 = vsel %vm581, %v332, 0.0
        %586 = vadd.xlane.f32.xlu0 %v585
        %v587 = vpop.xlane.xlu0 %586
        %v588 = vmul.f32 %v338, %v584
        %v589 = vsub.f32 %v337, %v588
        %v590 = vadd.f32 %v589, %v587
        %v592 = vrot.slane %v590, 7
        %v594 = vadd.f32 %v558, %v592
        %v595 = vmax.f32 %v579, 0.0
        %v596 = vmax.f32 %v580, 0.0
        %v597 = vsub.f32 0.0, %v595
        %v598 = vsub.f32 0.0, %v596
        %v599 = vmul.f32 %v597, 1.442695
        %v600 = vpow.pop %v599
        %v601 = vmul.f32 %v598, 1.442695
        %v602 = vpow.pop %v601
        %vm603 = vcmask 130048
        %v604 = vsel %vm603, %v600, 0.0
        %v605 = vsel %vm603, %v602, 0.0
        %v606 = vadd.f32 %v604, %v605
        %v607 = vrot.slane %v606, 4
        %v608 = vadd.f32 %v606, %v607
        %v609 = vrot.slane %v608, 2
        %v610 = vadd.f32 %v608, %v609
        %v611 = vrot.slane %v610, 1
        %v612 = vadd.f32 %v610, %v611
        %v613 = vrcp.pop %v612
        %v614 = vmul.f32 %v600, %v613
        %v615 = vmul.f32 %v602, %v613
        %616 = vst.msk [vmem:[%s282] sm:$0xff] %vm603, %v614
        %617 = vst.msk [vmem:[%s282 + $0x8] sm:$0xff] %vm603, %v615
        %v618 = vsel %vm603, %v614, 0.0
        %v619 = vsel %vm603, %v615, 0.0
        %v620 = vadd.f32 %v618, %v619
        %v621 = vrot.slane %v620, 4
        %v622 = vadd.f32 %v620, %v621
        %v623 = vrot.slane %v622, 2
        %v624 = vadd.f32 %v622, %v623
        %v625 = vrot.slane %v624, 1
        %v626 = vadd.f32 %v624, %v625
        %v627 = vmul.f32 %v614, %v614
        %v628 = vmul.f32 %v615, %v615
        %v629 = vsel %vm603, %v627, 0.0
        %630 = vadd.xlane.f32.xlu0 %v629
        %v631 = vpop.xlane.xlu0 %630
        %v632 = vsel %vm603, %v628, 0.0
        %633 = vadd.xlane.f32.xlu0 %v632
        %v634 = vpop.xlane.xlu0 %633
        %v635 = vadd.f32 %v631, %v634
        %v636 = vrot.slane %v635, 4
        %v637 = vadd.f32 %v635, %v636
        %v638 = vrot.slane %v637, 2
        %v639 = vadd.f32 %v637, %v638
        %v640 = vrot.slane %v639, 1
        %v641 = vadd.f32 %v639, %v640
        %v642 = vmul.f32 %v626, %v594
        %v643 = vsel %vm328, %v642, 0.0
        %644 = vadd.xlane.f32.xlu0 %v643
        %v645 = vpop.xlane.xlu0 %644
        %vm646 = vcmask 7168
        %v647 = vsel %vm646, %v641, %v645
        %vm648 = vcmask 8192
        %649 = vst.msk [vmem:[%s299] sm:$0x1] %vm648, %v647
        %v650 = vlaneseq
        %v651 = vshrl.u32 %v650, 7
        %v652 = vadd.s32 %v651, 8
        %v653 = vlaneseq
        %v654 = vand.u32 %v653, 127
        %vm655 = vcmp.eq.s32.totalorder %v651, %v654
        %vm656 = vcmp.eq.s32.totalorder %v652, %v654
        %v657 = vsel %vm655, 1, 0
        %v658 = vsel %vm656, 1, 0
        %v659 = vcvt.s32.f32 %v657
        %v660 = vcvt.s32.f32 %v658
        %v661 = vmul.f32 %v659, %v626
        %v662 = vmul.f32 %v660, %v626
        %v663 = vsub.f32 %v661, %v614
        %v664 = vsub.f32 %v662, %v615
        %v665 = vsub.f32 %v663, %v659
        %v666 = vsub.f32 %v664, %v660
        %v667 = vpack.c.bf16 %v302, %v301
        %v668 = vld [vmem:[%s3] sm:$0xf]
        %vm669 = vcmask 64512
        %v671 = vsel %vm669, %v667, 0
        %vm673 = vcmask 1043456
        %v675 = vsel %vm673, %v668, 0
        %677 = vmatprep.subr.bf16.mxu0 0
        %678 = vmatpush1.bf16.msra.mxu0 0
        %679 = vmatprep.subr.bf16.mxu0 0
        %680 = vmatpush1.bf16.msra.mxu0 0
        %681 = vmatprep.subr.bf16.mxu0 0
        %682 = vmatpush1.bf16.msra.mxu0 0
        %683 = vmatprep.subr.bf16.mxu0 0
        %684 = vmatpush1.bf16.msra.mxu0 0
        %685 = vmatprep.subr.bf16.mxu0 0
        %686 = vmatpush1.bf16.msra.mxu0 0
        %687 = vmatprep.subr.bf16.mxu0 0
        %688 = vmatpush1.bf16.msra.mxu0 0
        %689 = vmatprep.subr.bf16.mxu0 0
        %690 = vmatpush1.bf16.msra.mxu0 0
        %691 = vmatprep.subr.bf16.mxu0 0
        %692 = vmatpush1.bf16.msra.mxu0 %v675
        %693 = vmatprep.subr.bf16.mxu0 0
        %694 = vmatpush2.bf16.msra.mxu0 0
        %695 = vmatprep.subr.bf16.mxu0 0
        %696 = vmatpush2.bf16.msra.mxu0 0
        %697 = vmatprep.subr.bf16.mxu0 0
        %698 = vmatpush2.bf16.msra.mxu0 0
        %699 = vmatprep.subr.bf16.mxu0 0
        %700 = vmatpush2.bf16.msra.mxu0 0
        %701 = vmatprep.subr.bf16.mxu0 0
        %702 = vmatpush2.bf16.msra.mxu0 0
        %703 = vmatprep.subr.bf16.mxu0 0
        %704 = vmatpush2.bf16.msra.mxu0 0
        %705 = vmatprep.subr.bf16.mxu0 0
        %706 = vmatpush2.bf16.msra.mxu0 0
        %707 = vmatprep.subr.bf16.mxu0 0
        %708 = vmatpush2.bf16.msra.mxu0 0
        %709 = vmatprep.mubr.bf16.mxu0 0
        %710 = vmatmul.mubr.bf16.gmra.mxu0 %v671
        %v711 = vpop.f32.mrf.mxu0
        %v712 = vadd.f32 0.0, %v711
        %v713 = vpop.f32.mrf.mxu0
        %v714 = vpop.f32.mrf.mxu0
        %v715 = vadd.f32 0.0, %v714
        %v716 = vpop.f32.mrf.mxu0
        %717 = vdwg.mxu0
        %s718 = scalar_lea.vmem %s3, 4
        %v719 = vld [vmem:[%s718] sm:$0xf]
        %v721 = vsel %vm673, %v719, 0
        %723 = vmatprep.subr.bf16.mxu0 0
        %724 = vmatpush1.bf16.msra.mxu0 0
        %725 = vmatprep.subr.bf16.mxu0 0
        %726 = vmatpush1.bf16.msra.mxu0 0
        %727 = vmatprep.subr.bf16.mxu0 0
        %728 = vmatpush1.bf16.msra.mxu0 0
        %729 = vmatprep.subr.bf16.mxu0 0
        %730 = vmatpush1.bf16.msra.mxu0 0
        %731 = vmatprep.subr.bf16.mxu0 0
        %732 = vmatpush1.bf16.msra.mxu0 0
        %733 = vmatprep.subr.bf16.mxu0 0
        %734 = vmatpush1.bf16.msra.mxu0 0
        %735 = vmatprep.subr.bf16.mxu0 0
        %736 = vmatpush1.bf16.msra.mxu0 0
        %737 = vmatprep.subr.bf16.mxu0 0
        %738 = vmatpush1.bf16.msra.mxu0 %v721
        %739 = vmatprep.subr.bf16.mxu0 0
        %740 = vmatpush2.bf16.msra.mxu0 0
        %741 = vmatprep.subr.bf16.mxu0 0
        %742 = vmatpush2.bf16.msra.mxu0 0
        %743 = vmatprep.subr.bf16.mxu0 0
        %744 = vmatpush2.bf16.msra.mxu0 0
        %745 = vmatprep.subr.bf16.mxu0 0
        %746 = vmatpush2.bf16.msra.mxu0 0
        %747 = vmatprep.subr.bf16.mxu0 0
        %748 = vmatpush2.bf16.msra.mxu0 0
        %749 = vmatprep.subr.bf16.mxu0 0
        %750 = vmatpush2.bf16.msra.mxu0 0
        %751 = vmatprep.subr.bf16.mxu0 0
        %752 = vmatpush2.bf16.msra.mxu0 0
        %753 = vmatprep.subr.bf16.mxu0 0
        %754 = vmatpush2.bf16.msra.mxu0 0
        %755 = vmatprep.mubr.bf16.mxu0 0
        %756 = vmatmul.mubr.bf16.gmra.mxu0 %v671
        %v757 = vpop.f32.mrf.mxu0
        %v758 = vadd.f32 0.0, %v757
        %v759 = vpop.f32.mrf.mxu0
        %v760 = vpop.f32.mrf.mxu0
        %v761 = vadd.f32 0.0, %v760
        %v762 = vpop.f32.mrf.mxu0
        %763 = vdwg.mxu0
        %s764 = scalar_lea.vmem %s3, 8
        %v765 = vld [vmem:[%s764] sm:$0xf]
        %v767 = vsel %vm673, %v765, 0
        %769 = vmatprep.subr.bf16.mxu0 0
        %770 = vmatpush1.bf16.msra.mxu0 0
        %771 = vmatprep.subr.bf16.mxu0 0
        %772 = vmatpush1.bf16.msra.mxu0 0
        %773 = vmatprep.subr.bf16.mxu0 0
        %774 = vmatpush1.bf16.msra.mxu0 0
        %775 = vmatprep.subr.bf16.mxu0 0
        %776 = vmatpush1.bf16.msra.mxu0 0
        %777 = vmatprep.subr.bf16.mxu0 0
        %778 = vmatpush1.bf16.msra.mxu0 0
        %779 = vmatprep.subr.bf16.mxu0 0
        %780 = vmatpush1.bf16.msra.mxu0 0
        %781 = vmatprep.subr.bf16.mxu0 0
        %782 = vmatpush1.bf16.msra.mxu0 0
        %783 = vmatprep.subr.bf16.mxu0 0
        %784 = vmatpush1.bf16.msra.mxu0 %v767
        %785 = vmatprep.subr.bf16.mxu0 0
        %786 = vmatpush2.bf16.msra.mxu0 0
        %787 = vmatprep.subr.bf16.mxu0 0
        %788 = vmatpush2.bf16.msra.mxu0 0
        %789 = vmatprep.subr.bf16.mxu0 0
        %790 = vmatpush2.bf16.msra.mxu0 0
        %791 = vmatprep.subr.bf16.mxu0 0
        %792 = vmatpush2.bf16.msra.mxu0 0
        %793 = vmatprep.subr.bf16.mxu0 0
        %794 = vmatpush2.bf16.msra.mxu0 0
        %795 = vmatprep.subr.bf16.mxu0 0
        %796 = vmatpush2.bf16.msra.mxu0 0
        %797 = vmatprep.subr.bf16.mxu0 0
        %798 = vmatpush2.bf16.msra.mxu0 0
        %799 = vmatprep.subr.bf16.mxu0 0
        %800 = vmatpush2.bf16.msra.mxu0 0
        %801 = vmatprep.mubr.bf16.mxu0 0
        %802 = vmatmul.mubr.bf16.gmra.mxu0 %v671
        %v803 = vpop.f32.mrf.mxu0
        %v804 = vadd.f32 0.0, %v803
        %v805 = vpop.f32.mrf.mxu0
        %v806 = vpop.f32.mrf.mxu0
        %v807 = vadd.f32 0.0, %v806
        %v808 = vpop.f32.mrf.mxu0
        %809 = vdwg.mxu0
        %v810 = vmul.f32 %v665, 2.0
        %v811 = vmul.f32 %v666, 2.0
        %v812 = vmul.f32 %v810, %v665
        %v813 = vmul.f32 %v811, %v666
        %v814 = vsub.f32 %v812, %v659
        %v815 = vsub.f32 %v813, %v660
        %818 = vrot.lane.b32.xlu0 %v814, 16
        %v819 = vpop.permute.xlu0 %818
        %820 = vrot.lane.b32.xlu0 %v815, 16
        %v821 = vpop.permute.xlu0 %820
        %v824 = vsel %vm603, %v665, %v819
        %v825 = vsel %vm603, %v666, %v821
        %v826 = vpack.c.bf16 %v825, %v824
        %v827 = vpack.c.bf16 %v761, %v758
        %v828 = vpack.c.bf16 %v807, %v804
        %vm829 = vcmask 261120
        %v831 = vsel %vm829, %v826, 0
        %833 = vmatprep.subr.bf16.mxu0 0
        %834 = vmatpush1.bf16.msra.mxu0 0
        %835 = vmatprep.subr.bf16.mxu0 0
        %836 = vmatpush1.bf16.msra.mxu0 0
        %837 = vmatprep.subr.bf16.mxu0 0
        %838 = vmatpush1.bf16.msra.mxu0 0
        %839 = vmatprep.subr.bf16.mxu0 0
        %840 = vmatpush1.bf16.msra.mxu0 0
        %841 = vmatprep.subr.bf16.mxu0 0
        %842 = vmatpush1.bf16.msra.mxu0 0
        %843 = vmatprep.subr.bf16.mxu0 0
        %844 = vmatpush1.bf16.msra.mxu0 0
        %845 = vmatprep.subr.bf16.mxu0 0
        %846 = vmatpush1.bf16.msra.mxu0 %v828
        %847 = vmatprep.subr.bf16.mxu0 0
        %848 = vmatpush1.bf16.msra.mxu0 %v827
        %849 = vmatprep.subr.bf16.mxu0 0
        %850 = vmatpush2.bf16.msra.mxu0 0
        %851 = vmatprep.subr.bf16.mxu0 0
        %852 = vmatpush2.bf16.msra.mxu0 0
        %853 = vmatprep.subr.bf16.mxu0 0
        %854 = vmatpush2.bf16.msra.mxu0 0
        %855 = vmatprep.subr.bf16.mxu0 0
        %856 = vmatpush2.bf16.msra.mxu0 0
        %857 = vmatprep.subr.bf16.mxu0 0
        %858 = vmatpush2.bf16.msra.mxu0 0
        %859 = vmatprep.subr.bf16.mxu0 0
        %860 = vmatpush2.bf16.msra.mxu0 0
        %861 = vmatprep.subr.bf16.mxu0 0
        %862 = vmatpush2.bf16.msra.mxu0 0
        %863 = vmatprep.subr.bf16.mxu0 0
        %864 = vmatpush2.bf16.msra.mxu0 0
        %865 = vmatprep.mubr.bf16.mxu0 0
        %866 = vmatmul.mubr.bf16.gmra.mxu0 %v831
        %v867 = vpop.f32.mrf.mxu0
        %v868 = vadd.f32 0.0, %v867
        %v869 = vpop.f32.mrf.mxu0
        %v870 = vpop.f32.mrf.mxu0
        %v871 = vadd.f32 0.0, %v870
        %v872 = vpop.f32.mrf.mxu0
        %873 = vdwg.mxu0
        %v874 = vadd.f32 %v712, %v868
        %v875 = vadd.f32 %v715, %v871
        %v876 = vmax.f32 %v874, 0.0
        %v877 = vmax.f32 %v875, 0.0
        %878 = vst.msk [vmem:[%s275] sm:$0xff] %vm829, %v876
        %879 = vst.msk [vmem:[%s275 + $0x8] sm:$0xff] %vm829, %v877
        %s880 = sand.u32 %s127, 1
        %s881 = scalar_lea.sflag [#allocation3], %s880
        %s882 = sand.u32 %s127, 1
        %s883 = smul.addr %s882, 16
        %s884 = scalar_lea.vmem [#allocation5], %s883
        %s885 = sand.u32 %s153, 1
        %s886 = scalar_lea.sflag [#allocation7], %s885
        %s887 = sand.u32 %s153, 1
        %s888 = smul.addr %s887, 16
        %s889 = scalar_lea.vmem [#allocation6], %s888
        %p890 = scmp.lt.s32.totalorder %s25, 1
        %s891 = scalar_select %p890, %s25, 1
        %s892 = scalar_lea.vmem %s6, %s891
        // Predicated region
        $region41: #{_lambda_.1} parent=35 // pred_check
          %p893 = pneg %p137
        $region42: #{_lambda_.1} parent=35 // pred_check_branch
          %895 = sbr.rel (%p893) target = $region44
        $region43: #{_lambda_.1} parent=35 // pred_region
          %s897 = ssub.s32 256, 256
          %898 = vsyncadd %s881, %s897
          %s899 = smul.addr %s25, 2
          %s900 = smul.addr %s899, 128
          %s901 = scalar_lea.hbm %s4, %s900
          %s902 = sshll.u32 %s884, 4
          %s903 = int_to_ptr.vmem [resolvable:$true] %s902
          %908 = dma.vmem_to_hbm [thread:$0]  %s903, 256, %s901, %s881, 128, 128, 8
        $region44: #{_lambda_.1} parent=35 // pred_fallthru
          _
        // Predicated region
        $region45: #{_lambda_.1} parent=35 // pred_check
          %p909 = pneg %p163
        $region46: #{_lambda_.1} parent=35 // pred_check_branch
          %911 = sbr.rel (%p909) target = $region48
        $region47: #{_lambda_.1} parent=35 // pred_region
          %s913 = ssub.s32 256, 256
          %914 = vsyncadd %s886, %s913
          %s915 = smul.addr %s25, 2
          %s916 = smul.addr %s915, 128
          %s917 = scalar_lea.hbm %s5, %s916
          %s918 = sshll.u32 %s889, 4
          %s919 = int_to_ptr.vmem [resolvable:$true] %s918
          %924 = dma.vmem_to_hbm [thread:$0]  %s919, 256, %s917, %s886, 128, 128, 8
        $region48: #{_lambda_.1} parent=35 // pred_fallthru
          _
        // Predicated region
        $region49: #{_lambda_.1} parent=35 // pred_check
          %p925 = pneg %p189
        $region50: #{_lambda_.1} parent=35 // pred_check_branch
          %927 = sbr.rel (%p925) target = $region52
        $region51: #{_lambda_.1} parent=35 // pred_region
          _
        $region52: #{_lambda_.1} parent=35 // pred_fallthru
          _
      $region36: #{_lambda_.1} parent=5 // pred_fallthru
        _
      %p928 = scmp.le.s32.totalorder 2, %s20
      // Predicated region
      $region53: #{_lambda_.1} parent=5 // pred_check
        %p929 = pneg %p928
      $region54: #{_lambda_.1} parent=5 // pred_check_branch
        %931 = sbr.rel (%p929) target = $region56
      $region55: #{_lambda_.1} parent=5 // pred_region
        %s932 = ssub.s32 %s20, 2
        // Predicated region
        $region57: #{_lambda_.1} parent=55 // pred_check
          %p933 = pneg %p143
        $region58: #{_lambda_.1} parent=55 // pred_check_branch
          %935 = sbr.rel (%p933) target = $region60
        $region59: #{_lambda_.1} parent=55 // pred_region
          %s936 = sand.u32 %s128, 1
          %s937 = scalar_lea.sflag [#allocation3], %s936
          %s938 = sand.u32 %s128, 1
          %s939 = smul.addr %s938, 16
          %s940 = scalar_lea.vmem [#allocation5], %s939
          %941 = dma.done %s937, 256
        $region60: #{_lambda_.1} parent=55 // pred_fallthru
          _
        // Predicated region
        $region61: #{_lambda_.1} parent=55 // pred_check
          %p942 = pneg %p169
        $region62: #{_lambda_.1} parent=55 // pred_check_branch
          %944 = sbr.rel (%p942) target = $region64
        $region63: #{_lambda_.1} parent=55 // pred_region
          %s945 = sand.u32 %s154, 1
          %s946 = scalar_lea.sflag [#allocation7], %s945
          %s947 = sand.u32 %s154, 1
          %s948 = smul.addr %s947, 16
          %s949 = scalar_lea.vmem [#allocation6], %s948
          %950 = dma.done %s946, 256
        $region64: #{_lambda_.1} parent=55 // pred_fallthru
          _
        // Predicated region
        $region65: #{_lambda_.1} parent=55 // pred_check
          %p951 = pneg %p195
        $region66: #{_lambda_.1} parent=55 // pred_check_branch
          %953 = sbr.rel (%p951) target = $region68
        $region67: #{_lambda_.1} parent=55 // pred_region
          %p954 = scmp.lt.s32.totalorder %s26, 1
          %s955 = scalar_select %p954, %s26, 1
          %s956 = scalar_lea.vmem %s6, %s955
        $region68: #{_lambda_.1} parent=55 // pred_fallthru
          _
      $region56: #{_lambda_.1} parent=5 // pred_fallthru
        _
    $region6: #{_lambda_.1} parent=1 // loop_footer
      %s24 = sadd.s32 1, %s20
    $region7: #{_lambda_.1} parent=1 // loop_footer_branch
      %19 = sbr.rel target = $region3
    $region8: #{_lambda_.1} parent=1 // loop_exit
      _
    %957 = vsyncpa [#allocation3], 1
    %s958 = scalar_lea.sflag [#allocation3], 1
    %959 = vsyncpa %s958, 1
    %960 = vsyncpa [#allocation7], 1
    %s961 = scalar_lea.sflag [#allocation7], 1
    %962 = vsyncpa %s961, 1
    %963 = vsyncpa [#allocation4], 1
    %s964 = scalar_lea.sflag [#allocation4], 1
    %965 = vsyncpa %s964, 1

</llo_original>
